<compile_context>
chip_gen: v7x
topology: tpu7x:2x2x1
jax: 0.10.0
libtpu: 0.0.40
codegen_flags: <defaults>
</compile_context>

<pallas_src>
import functools

import jax
import jax.numpy as jnp
from jax.experimental import pallas as pl
from jax.experimental.pallas import tpu as pltpu

_MIB = 1024 * 1024

# Per-row (row = one point of one batch element) VMEM live set:
#   streamed input block (TB, TN, 4) f32: trailing dim 4 lane-pads to 128
#     -> 512 B/row per buffer, x2 double-buffered ................ ~1024 B
#   h1 f32 (row, 64)  + bf16 MXU copy ............................ ~ 384 B
#   h2 f32 (row, 128) + bf16 MXU copy ............................ ~ 768 B
#   h3 f32 (row, 256) ............................................ ~1024 B
#   => budget ~3.5 KiB/row (NOT just the 1 KiB h3 slab).
_ROW_BYTES = 3584
_WEIGHT_BYTES = 512 * 1024  # all weight/bias blocks (double-buffered) + slack


@functools.lru_cache(maxsize=1)
def _vmem_capacity_bytes():
    """Physical VMEM per TensorCore; conservative 64 MiB (v7x) fallback."""
    try:
        cap = getattr(pltpu.get_tpu_info(), "vmem_capacity_bytes", None)
        if cap:
            return int(cap)
    except Exception:  # query unavailable (e.g. interpret mode) -> be conservative
        pass
    return 64 * _MIB


def _vmem_budget():
    """Returns (vmem_limit_bytes, row_cap) per TPU generation."""
    if _vmem_capacity_bytes() >= 100 * _MIB:  # v5e / v6e: 128 MiB physical VMEM
        return 64 * _MIB, 16384
    return 32 * _MIB, 8192                    # v7x: 64 MiB physical VMEM


# ----------------------------- Pallas kernel -------------------------------

def _encoder_kernel(x_ref,                       # (TB, TN, 4)  point block, f32
                    w1_ref, b1_ref,              # (4, H1) f32, (1, H1) f32
                    w2_ref, b2_ref,              # (H1, H2) bf16, (1, H2) f32
                    w3_ref, b3_ref,              # (H2, H3) bf16, (1, H3) f32
                    pool_ref):                   # (TB, H3) f32 output (pooled slab)
    k = pl.program_id(1)                         # point (reduction) axis

    @pl.when(k == 0)
    def _():
        # h3 is post-ReLU (>= 0), so 0-init is equivalent to -inf.  NOTE: this
        # silently breaks if the ReLU is removed or if padded/masked points
        # with large-negative sentinels are ever injected.
        pool_ref[...] = jnp.zeros_like(pool_ref)

    tb, tn, fin = x_ref.shape
    x = x_ref[...].reshape(tb * tn, fin)         # (M, 4) f32
    w1 = w1_ref[...]

    # Layer 1 on the VPU: K=4 badly under-fills the MXU's systolic K dimension,
    # so do it as 4 broadcast multiply-adds on otherwise-idle VALU slots (f32).
    # (Binding unit at these dims is MXU push cadence; this is filler work.)
    h = x[:, 0:1] * w1[0:1, :] + b1_ref[...]
    for f in range(1, fin):                      # fin == 4, unrolled at trace time
        h = h + x[:, f:f + 1] * w1[f:f + 1, :]
    h = jnp.maximum(h, 0.0)                      # (M, H1) f32

    # Layers 2/3 on the MXU: bf16 operands (MXU-native on all generations),
    # f32 accumulation; bias add / ReLU / pooling kept in f32.
    h = jnp.maximum(
        jnp.dot(h.astype(jnp.bfloat16), w2_ref[...],
                preferred_element_type=jnp.float32) + b2_ref[...], 0.0)
    h = jnp.maximum(
        jnp.dot(h.astype(jnp.bfloat16), w3_ref[...],
                preferred_element_type=jnp.float32) + b3_ref[...], 0.0)

    # Running global max-pool over the point (reduction) axis.  The pooled
    # (TB, H3) slab IS the kernel output: same block index for every k, so it
    # stays resident in VMEM across the reduction and is stored once,
    # 256-lane dense.
    h = h.reshape(tb, tn, -1)
    pool_ref[...] = jnp.maximum(pool_ref[...], jnp.max(h, axis=1))


# ------------------------------ wrapper -------------------------------------

@functools.partial(jax.jit, static_argnames=("point_tile", "batch_tile"))
def single_frame_demo_encoder(demo_pcd, params, *, point_tile=None, batch_tile=None):
    """demo_pcd: (B, N, 4) f32 = [x, y, z, label]. Returns (emb (B, E), w (B, 1))."""
    w1, b1, w2, b2, w3, b3, wh, bh = params
    B, N, F = demo_pcd.shape
    H3 = w3.shape[1]

    vmem_limit, row_cap = _vmem_budget()
    max_rows = min(row_cap, max(1024, (vmem_limit - _WEIGHT_BYTES) // _ROW_BYTES))

    # ---- tile selection -----------------------------------------------------
    # Each grid step costs ~0.35us and the MXU wants lots of LHS rows, so make
    # the per-step row count as large as the per-generation VMEM budget allows.
    if batch_tile is None:
        batch_tile = B
        # Give the "parallel" batch axis >= 2 grid steps when B is big enough:
        # on v7x (2 TCs/chip) this is what lets the second TensorCore work.
        # Harmless on 1-TC parts (one extra step) as long as each step still
        # has plenty of rows.  Keep batch_tile % 8 == 0 for the output block.
        if B % 16 == 0 and (B // 2) * N >= 4096:
            batch_tile = B // 2
    if point_tile is None:
        point_tile = N
        while batch_tile * point_tile > max_rows and point_tile % 16 == 0:
            point_tile //= 2
    # TODO(synk): for very large N on v7x, additionally split the point axis
    # per core (partial max-pools + a tiny combine) so both TCs help on a
    # single batch element.

    # Latent block-shape constraints (Mosaic (8,128)/full-extent rule on the
    # output block, and tile-aligned in-kernel reshapes).
    assert B % batch_tile == 0 and N % point_tile == 0
    assert batch_tile == B or batch_tile % 8 == 0, (
        "batch_tile must equal B or be a multiple of 8 (output block (batch_tile, H3))")
    assert point_tile % 8 == 0, (
        "point_tile (and N when point_tile == N) must be a multiple of 8 so the "
        "in-kernel (tb,tn,4)->(tb*tn,4) and (rows,H3)->(tb,tn,H3) reshapes stay "
        "tile-aligned and free")

    # bf16 weights for the MXU layers; layer-1 (VPU) weights, all biases and
    # the accumulation / pooling path stay f32.
    w2b, w3b = w2.astype(jnp.bfloat16), w3.astype(jnp.bfloat16)

    grid = (B // batch_tile, N // point_tile)

    def _const_spec(shape):
        # Same weight tile every grid step.  (If tiles are ever pushed right up
        # to the VMEM limit, pipeline_mode=pl.Buffered(1) here would drop the
        # pointless second buffer (~0.2 MiB); not needed at the budgets above.)
        return pl.BlockSpec(shape, lambda i, k: (0,) * len(shape))

    grid_spec = pltpu.PrefetchScalarGridSpec(
        num_scalar_prefetch=0,
        grid=grid,
        in_specs=[
            # TODO(synk): for very large N, pre-transpose to channels-first
            # (B, 4, N) (points on lanes) to remove this block's 32x lane pad
            # and make the HBM->VMEM DMA contiguous; needs a points-on-lanes
            # layer 1 + one XLU transpose before layer 2.  At these dims the
            # kernel is MXU-bound and the pad is already budgeted (~1 KiB/row).
            pl.BlockSpec((batch_tile, point_tile, F), lambda i, k: (i, k, 0)),
            _const_spec(w1.shape), _const_spec(b1.shape),
            _const_spec(w2b.shape), _const_spec(b2.shape),
            _const_spec(w3b.shape), _const_spec(b3.shape),
        ],
        # The pooled slab is the output AND the cross-k accumulator: constant
        # block index along k keeps it resident in VMEM over the reduction.
        out_specs=pl.BlockSpec((batch_tile, H3), lambda i, k: (i, 0)),
    )

    pooled = pl.pallas_call(
        _encoder_kernel,
        out_shape=jax.ShapeDtypeStruct((B, H3), jnp.float32),
        grid_spec=grid_spec,
        compiler_params=pltpu.CompilerParams(
            # batch axis is independent (megacore-shardable on v7x); point axis
            # is the max-pool reduction and must stay "arbitrary".
            dimension_semantics=("parallel", "arbitrary"),
            # Per-generation budget: 64 MiB on 128 MiB parts (v5e/v6e),
            # 32 MiB on v7x (64 MiB physical); tiles above are sized to fit
            # with headroom for double-buffering.
            vmem_limit_bytes=vmem_limit,
        ),
    )(demo_pcd, w1, b1, w2b, b2, w3b, b3)

    # Head hoisted out of the kernel: one well-filled (B, H3) @ (H3, E+1) matmul
    # (f32) instead of B/batch_tile tiny per-tile MXU matmuls plus a 129-lane
    # (1-lane-masked) partial store.  Fuses with the slice / sigmoid that were
    # already in the wrapper.
    g = pooled @ wh + bh
    demo_embedding = g[:, :-1]
    w = jax.nn.sigmoid(g[:, -1:])
    return demo_embedding, w


# ------------------------- params + references -------------------------------

def init_params(key, in_dim=4, h1=64, h2=128, h3=256, emb_dims=128):
    ks = jax.random.split(key, 4)
    def lin(k, fan_in, fan_out):
        w = jax.random.normal(k, (fan_in, fan_out), jnp.float32) * (fan_in ** -0.5)
        b = jnp.zeros((1, fan_out), jnp.float32)
        return w, b
    w1, b1 = lin(ks[0], in_dim, h1)
    w2, b2 = lin(ks[1], h1, h2)
    w3, b3 = lin(ks[2], h2, h3)
    wh, bh = lin(ks[3], h3, emb_dims + 1)
    return (w1, b1, w2, b2, w3, b3, wh, bh)


def reference_forward(demo_pcd, params):
    """Pure-f32 module semantics."""
    w1, b1, w2, b2, w3, b3, wh, bh = params
    B, N, F = demo_pcd.shape
    h = jax.nn.relu(demo_pcd.reshape(B * N, F) @ w1 + b1)
    h = jax.nn.relu(h @ w2 + b2)
    h = jax.nn.relu(h @ w3 + b3)
    pooled = h.reshape(B, N, -1).max(axis=1)
    g = pooled @ wh + bh
    return g[:, :-1], jax.nn.sigmoid(g[:, -1:])


def reference_forward_matched(demo_pcd, params):
    """Reference with the kernel's mixed precision: VPU-style f32 layer 1,
    bf16-operand / f32-accum MXU layers 2/3, f32 head."""
    w1, b1, w2, b2, w3, b3, wh, bh = params
    bf = jnp.bfloat16
    B, N, F = demo_pcd.shape
    x = demo_pcd.reshape(B * N, F)
    h = x[:, 0:1] * w1[0:1, :] + b1
    for f in range(1, F):
        h = h + x[:, f:f + 1] * w1[f:f + 1, :]
    h = jax.nn.relu(h)
    h = jax.nn.relu(jnp.dot(h.astype(bf), w2.astype(bf),
                            preferred_element_type=jnp.float32) + b2)
    h = jax.nn.relu(jnp.dot(h.astype(bf), w3.astype(bf),
                            preferred_element_type=jnp.float32) + b3)
    pooled = h.reshape(B, N, -1).max(axis=1)
    g = pooled @ wh + bh
    return g[:, :-1], jax.nn.sigmoid(g[:, -1:])


# -------------------------------- main ---------------------------------------

def _make_cloud(key, B, N):
    k_pts, k_lbl = jax.random.split(key)
    xyz = jax.random.normal(k_pts, (B, N, 3), jnp.float32)
    label = (jax.random.uniform(k_lbl, (B, N, 1)) > 0.5).astype(jnp.float32)
    return jnp.concatenate([xyz, label], axis=-1)          # (B, N, 4)


def _run_and_check(demo_pcd, params, **tiles):
    emb, w = single_frame_demo_encoder(demo_pcd, params, **tiles)
    emb, w = jax.block_until_ready((emb, w))
    # Tight check against a precision-matched (bf16-MXU / f32-accum) reference.
    m_emb, m_w = reference_forward_matched(demo_pcd, params)
    assert jnp.allclose(emb, m_emb, atol=1e-2, rtol=1e-2)
    assert jnp.allclose(w, m_w, atol=2e-3, rtol=2e-3)
    # Loose sanity check against the pure-f32 module semantics (bf16 operands
    # on the MXU layers shift results by ~1e-2).
    r_emb, r_w = reference_forward(demo_pcd, params)
    assert jnp.allclose(emb, r_emb, atol=1e-1, rtol=1e-1)
    assert jnp.allclose(w, r_w, atol=2e-2, rtol=2e-2)
    return emb, w


if __name__ == "__main__":
    key = jax.random.PRNGKey(0)
    k_data, k_par, k_data2, k_data3 = jax.random.split(key, 4)

    B, N, emb_dims = 2, 128, 128
    params = init_params(k_par, in_dim=4, emb_dims=emb_dims)

    # Primary small case: B=2, N=128 -> grid (1, 1).
    demo_pcd = _make_cloud(k_data, B, N)
    emb, w = _run_and_check(demo_pcd, params)
    assert emb.shape == (B, emb_dims) and w.shape == (B, 1)

    # Multi-step point (reduction) axis: grid (1, 4), output-resident pooling.
    _run_and_check(_make_cloud(k_data2, 2, 512), params, point_tile=128)

    # Split batch axis (the v7x "parallel"/megacore path): grid (2, 1).
    _run_and_check(_make_cloud(k_data3, 16, 128), params, batch_tile=8)

    print("KERNEL_OK")
</pallas_src>

<mosaic_0001>
module attributes {stable_mosaic.version = 11 : i64} {
  func.func @_encoder_kernel(%arg0: i32, %arg1: i32, %arg2: memref<2x128x4xf32, #tpu.memory_space<vmem>>, %arg3: memref<4x64xf32, #tpu.memory_space<vmem>>, %arg4: memref<1x64xf32, #tpu.memory_space<vmem>>, %arg5: memref<64x128xbf16, #tpu.memory_space<vmem>>, %arg6: memref<1x128xf32, #tpu.memory_space<vmem>>, %arg7: memref<128x256xbf16, #tpu.memory_space<vmem>>, %arg8: memref<1x256xf32, #tpu.memory_space<vmem>>, %arg9: memref<2x256xf32, #tpu.memory_space<vmem>>) attributes {dimension_semantics = [#tpu.dimension_semantics<parallel>, #tpu.dimension_semantics<arbitrary>], iteration_bounds = array<i64: 1, 1>, scalar_prefetch = 0 : i64, scratch_operands = 0 : i64, tpu.core_type = #tpu.core_type<tc>, window_params = [{transform_indices = @transform_0, window_bounds = array<i64: 2, 128, 4>}, {pipeline_mode = #tpu.pipeline_mode<synchronous>, transform_indices = @transform_1, window_bounds = array<i64: 4, 64>}, {pipeline_mode = #tpu.pipeline_mode<synchronous>, transform_indices = @transform_2, window_bounds = array<i64: 1, 64>}, {pipeline_mode = #tpu.pipeline_mode<synchronous>, transform_indices = @transform_3, window_bounds = array<i64: 64, 128>}, {pipeline_mode = #tpu.pipeline_mode<synchronous>, transform_indices = @transform_4, window_bounds = array<i64: 1, 128>}, {pipeline_mode = #tpu.pipeline_mode<synchronous>, transform_indices = @transform_5, window_bounds = array<i64: 128, 256>}, {pipeline_mode = #tpu.pipeline_mode<synchronous>, transform_indices = @transform_6, window_bounds = array<i64: 1, 256>}, {transform_indices = @transform_7, window_bounds = array<i64: 2, 256>}]} {
    %c0_i32 = arith.constant 0 : i32
    %0 = arith.cmpi eq, %arg1, %c0_i32 : i32
    %1 = arith.extui %0 : i1 to i32
    %c0_i32_0 = arith.constant 0 : i32
    %2 = arith.cmpi ne, %1, %c0_i32_0 : i32
    scf.if %2 {
      %cst_24 = arith.constant 0.000000e+00 : f32
      %55 = vector.broadcast %cst_24 : f32 to vector<2x256xf32>
      %c0_25 = arith.constant 0 : index
      %c0_26 = arith.constant 0 : index
      %56 = vector.load %arg9[%c0_25, %c0_26] : memref<2x256xf32, #tpu.memory_space<vmem>>, vector<2x256xf32>
      tpu.vector_store %arg9[%c0_25, %c0_26], %55 {strides = array<i32>} : memref<2x256xf32, #tpu.memory_space<vmem>>, vector<2x256xf32>,
    } else {
    }
    %c0 = arith.constant 0 : index
    %c0_1 = arith.constant 0 : index
    %c0_2 = arith.constant 0 : index
    %3 = vector.load %arg2[%c0, %c0_1, %c0_2] : memref<2x128x4xf32, #tpu.memory_space<vmem>>, vector<2x128x4xf32>
    %4 = vector.shape_cast %3 : vector<2x128x4xf32> to vector<256x4xf32>
    %c0_3 = arith.constant 0 : index
    %c0_4 = arith.constant 0 : index
    %5 = vector.load %arg3[%c0_3, %c0_4] : memref<4x64xf32, #tpu.memory_space<vmem>>, vector<4x64xf32>
    %6 = vector.extract_strided_slice %4 {offsets = [0, 0], sizes = [256, 1], strides = [1, 1]} : vector<256x4xf32> to vector<256x1xf32>
    %7 = vector.extract_strided_slice %5 {offsets = [0, 0], sizes = [1, 64], strides = [1, 1]} : vector<4x64xf32> to vector<1x64xf32>
    %8 = vector.broadcast %6 : vector<256x1xf32> to vector<256x64xf32>
    %9 = vector.broadcast %7 : vector<1x64xf32> to vector<256x64xf32>
    %10 = arith.mulf %8, %9 : vector<256x64xf32>
    %c0_5 = arith.constant 0 : index
    %c0_6 = arith.constant 0 : index
    %11 = vector.load %arg4[%c0_5, %c0_6] : memref<1x64xf32, #tpu.memory_space<vmem>>, vector<1x64xf32>
    %12 = vector.broadcast %11 : vector<1x64xf32> to vector<256x64xf32>
    %13 = arith.addf %10, %12 : vector<256x64xf32>
    %14 = vector.extract_strided_slice %4 {offsets = [0, 1], sizes = [256, 1], strides = [1, 1]} : vector<256x4xf32> to vector<256x1xf32>
    %15 = vector.extract_strided_slice %5 {offsets = [1, 0], sizes = [1, 64], strides = [1, 1]} : vector<4x64xf32> to vector<1x64xf32>
    %16 = vector.broadcast %14 : vector<256x1xf32> to vector<256x64xf32>
    %17 = vector.broadcast %15 : vector<1x64xf32> to vector<256x64xf32>
    %18 = arith.mulf %16, %17 : vector<256x64xf32>
    %19 = arith.addf %13, %18 : vector<256x64xf32>
    %20 = vector.extract_strided_slice %4 {offsets = [0, 2], sizes = [256, 1], strides = [1, 1]} : vector<256x4xf32> to vector<256x1xf32>
    %21 = vector.extract_strided_slice %5 {offsets = [2, 0], sizes = [1, 64], strides = [1, 1]} : vector<4x64xf32> to vector<1x64xf32>
    %22 = vector.broadcast %20 : vector<256x1xf32> to vector<256x64xf32>
    %23 = vector.broadcast %21 : vector<1x64xf32> to vector<256x64xf32>
    %24 = arith.mulf %22, %23 : vector<256x64xf32>
    %25 = arith.addf %19, %24 : vector<256x64xf32>
    %26 = vector.extract_strided_slice %4 {offsets = [0, 3], sizes = [256, 1], strides = [1, 1]} : vector<256x4xf32> to vector<256x1xf32>
    %27 = vector.extract_strided_slice %5 {offsets = [3, 0], sizes = [1, 64], strides = [1, 1]} : vector<4x64xf32> to vector<1x64xf32>
    %28 = vector.broadcast %26 : vector<256x1xf32> to vector<256x64xf32>
    %29 = vector.broadcast %27 : vector<1x64xf32> to vector<256x64xf32>
    %30 = arith.mulf %28, %29 : vector<256x64xf32>
    %31 = arith.addf %25, %30 : vector<256x64xf32>
    %cst = arith.constant 0.000000e+00 : f32
    %32 = vector.broadcast %cst : f32 to vector<256x64xf32>
    %33 = arith.maximumf %31, %32 : vector<256x64xf32>
    %34 = arith.truncf %33 : vector<256x64xf32> to vector<256x64xbf16>
    %c0_7 = arith.constant 0 : index
    %c0_8 = arith.constant 0 : index
    %35 = vector.load %arg5[%c0_7, %c0_8] : memref<64x128xbf16, #tpu.memory_space<vmem>>, vector<64x128xbf16>
    %cst_9 = arith.constant dense<0.000000e+00> : vector<256x128xf32>
    %36 = tpu.matmul %34, %35, %cst_9 {dimension_numbers = #tpu.dot_dimension_numbers<[1], [0], [0], [1], [0, 0, 1, 1], [], []>} : vector<256x64xbf16>, vector<64x128xbf16>, vector<256x128xf32> -> vector<256x128xf32>
    %c0_10 = arith.constant 0 : index
    %c0_11 = arith.constant 0 : index
    %37 = vector.load %arg6[%c0_10, %c0_11] : memref<1x128xf32, #tpu.memory_space<vmem>>, vector<1x128xf32>
    %38 = vector.broadcast %37 : vector<1x128xf32> to vector<256x128xf32>
    %39 = arith.addf %36, %38 : vector<256x128xf32>
    %cst_12 = arith.constant 0.000000e+00 : f32
    %40 = vector.broadcast %cst_12 : f32 to vector<256x128xf32>
    %41 = arith.maximumf %39, %40 : vector<256x128xf32>
    %42 = arith.truncf %41 : vector<256x128xf32> to vector<256x128xbf16>
    %c0_13 = arith.constant 0 : index
    %c0_14 = arith.constant 0 : index
    %43 = vector.load %arg7[%c0_13, %c0_14] : memref<128x256xbf16, #tpu.memory_space<vmem>>, vector<128x256xbf16>
    %cst_15 = arith.constant dense<0.000000e+00> : vector<256x256xf32>
    %44 = tpu.matmul %42, %43, %cst_15 {dimension_numbers = #tpu.dot_dimension_numbers<[1], [0], [0], [1], [0, 0, 1, 1], [], []>} : vector<256x128xbf16>, vector<128x256xbf16>, vector<256x256xf32> -> vector<256x256xf32>
    %c0_16 = arith.constant 0 : index
    %c0_17 = arith.constant 0 : index
    %45 = vector.load %arg8[%c0_16, %c0_17] : memref<1x256xf32, #tpu.memory_space<vmem>>, vector<1x256xf32>
    %46 = vector.broadcast %45 : vector<1x256xf32> to vector<256x256xf32>
    %47 = arith.addf %44, %46 : vector<256x256xf32>
    %cst_18 = arith.constant 0.000000e+00 : f32
    %48 = vector.broadcast %cst_18 : f32 to vector<256x256xf32>
    %49 = arith.maximumf %47, %48 : vector<256x256xf32>
    %50 = vector.shape_cast %49 : vector<256x256xf32> to vector<2x128x256xf32>
    %c0_19 = arith.constant 0 : index
    %c0_20 = arith.constant 0 : index
    %51 = vector.load %arg9[%c0_19, %c0_20] : memref<2x256xf32, #tpu.memory_space<vmem>>, vector<2x256xf32>
    %cst_21 = arith.constant dense<0xFF800000> : vector<2x256xf32>
    %52 = vector.multi_reduction <maximumf>, %50, %cst_21 [1] : vector<2x128x256xf32> to vector<2x256xf32>
    %53 = arith.maximumf %51, %52 : vector<2x256xf32>
    %c0_22 = arith.constant 0 : index
    %c0_23 = arith.constant 0 : index
    %54 = vector.load %arg9[%c0_22, %c0_23] : memref<2x256xf32, #tpu.memory_space<vmem>>, vector<2x256xf32>
    tpu.vector_store %arg9[%c0_22, %c0_23], %53 {strides = array<i32>} : memref<2x256xf32, #tpu.memory_space<vmem>>, vector<2x256xf32>,
    return
  }
  func.func @transform_0(%arg0: i32, %arg1: i32) -> (i32, i32, i32) {
    %c0_i32 = arith.constant 0 : i32
    %c0_i32_0 = arith.constant 0 : i32
    return %arg0, %arg1, %c0_i32 : i32, i32, i32
  }
  func.func @transform_1(%arg0: i32, %arg1: i32) -> (i32, i32) {
    %c0_i32 = arith.constant 0 : i32
    %c0_i32_0 = arith.constant 0 : i32
    %c0_i32_1 = arith.constant 0 : i32
    return %c0_i32, %c0_i32_0 : i32, i32
  }
  func.func @transform_2(%arg0: i32, %arg1: i32) -> (i32, i32) {
    %c0_i32 = arith.constant 0 : i32
    %c0_i32_0 = arith.constant 0 : i32
    %c0_i32_1 = arith.constant 0 : i32
    return %c0_i32, %c0_i32_0 : i32, i32
  }
  func.func @transform_3(%arg0: i32, %arg1: i32) -> (i32, i32) {
    %c0_i32 = arith.constant 0 : i32
    %c0_i32_0 = arith.constant 0 : i32
    %c0_i32_1 = arith.constant 0 : i32
    return %c0_i32, %c0_i32_0 : i32, i32
  }
  func.func @transform_4(%arg0: i32, %arg1: i32) -> (i32, i32) {
    %c0_i32 = arith.constant 0 : i32
    %c0_i32_0 = arith.constant 0 : i32
    %c0_i32_1 = arith.constant 0 : i32
    return %c0_i32, %c0_i32_0 : i32, i32
  }
  func.func @transform_5(%arg0: i32, %arg1: i32) -> (i32, i32) {
    %c0_i32 = arith.constant 0 : i32
    %c0_i32_0 = arith.constant 0 : i32
    %c0_i32_1 = arith.constant 0 : i32
    return %c0_i32, %c0_i32_0 : i32, i32
  }
  func.func @transform_6(%arg0: i32, %arg1: i32) -> (i32, i32) {
    %c0_i32 = arith.constant 0 : i32
    %c0_i32_0 = arith.constant 0 : i32
    %c0_i32_1 = arith.constant 0 : i32
    return %c0_i32, %c0_i32_0 : i32, i32
  }
  func.func @transform_7(%arg0: i32, %arg1: i32) -> (i32, i32) {
    %c0_i32 = arith.constant 0 : i32
    %c0_i32_0 = arith.constant 0 : i32
    return %arg0, %c0_i32 : i32, i32
  }
}

</mosaic_0001>

<llo_original>
// kernel: single_frame_demo_encoder.1
$region0: #{single_frame_demo_encoder.1}
  #allocation0 [shape = 'u32[]', space=smem, size = 0x4, offset = 0x4, fixed_abs, tag = 'smem constant byte address 0x4 - core index']
  #allocation1 [shape = 'u32[144,128]{1,0:T(1,128)}', space=vmem, size = 0x12000, scoped, tag = 'internal scratch']
  %s0 = inlined_call_operand.vmem [shape: f32[2,128,4], index: 0, kind: input, shape index: {}]
  %s1 = inlined_call_operand.vmem [shape: f32[4,64], index: 1, kind: input, shape index: {}]
  %s2 = inlined_call_operand.vmem [shape: f32[1,64], index: 2, kind: input, shape index: {}]
  %s3 = inlined_call_operand.vmem [shape: bf16[64,128], index: 3, kind: input, shape index: {}]
  %s4 = inlined_call_operand.vmem [shape: f32[1,128], index: 4, kind: input, shape index: {}]
  %s5 = inlined_call_operand.vmem [shape: bf16[128,256], index: 5, kind: input, shape index: {}]
  %s6 = inlined_call_operand.vmem [shape: f32[1,256], index: 6, kind: input, shape index: {}]
  %s7 = inlined_call_operand.vmem [shape: f32[2,256], index: 7, kind: output, shape index: {}]
  %s8 = sld [smem:[#allocation0]]
  $region42: #{single_frame_demo_encoder.1} parent=0
    _
  %s10 = ssub.s32 1, %s8
  %s11 = scalar_select 0, %s10, %s8
  // Predicated region
  $region2: #{single_frame_demo_encoder.1} parent=0 // pred_check
    _
  $region3: #{single_frame_demo_encoder.1} parent=0 // pred_check_branch
    %13 = sbr.rel (0) target = $region5
  $region4: #{single_frame_demo_encoder.1} parent=0 // pred_region
    _
  $region5: #{single_frame_demo_encoder.1} parent=0 // pred_fallthru
    _
  // Predicated region
  $region6: #{single_frame_demo_encoder.1} parent=0 // pred_check
    _
  $region7: #{single_frame_demo_encoder.1} parent=0 // pred_check_branch
    %15 = sbr.rel (0) target = $region9
  $region8: #{single_frame_demo_encoder.1} parent=0 // pred_region
    _
  $region9: #{single_frame_demo_encoder.1} parent=0 // pred_fallthru
    _
  // Predicated region
  $region10: #{single_frame_demo_encoder.1} parent=0 // pred_check
    _
  $region11: #{single_frame_demo_encoder.1} parent=0 // pred_check_branch
    %17 = sbr.rel (0) target = $region13
  $region12: #{single_frame_demo_encoder.1} parent=0 // pred_region
    _
  $region13: #{single_frame_demo_encoder.1} parent=0 // pred_fallthru
    _
  // Predicated region
  $region14: #{single_frame_demo_encoder.1} parent=0 // pred_check
    _
  $region15: #{single_frame_demo_encoder.1} parent=0 // pred_check_branch
    %19 = sbr.rel (0) target = $region17
  $region16: #{single_frame_demo_encoder.1} parent=0 // pred_region
    _
  $region17: #{single_frame_demo_encoder.1} parent=0 // pred_fallthru
    _
  // Predicated region
  $region18: #{single_frame_demo_encoder.1} parent=0 // pred_check
    _
  $region19: #{single_frame_demo_encoder.1} parent=0 // pred_check_branch
    %21 = sbr.rel (0) target = $region21
  $region20: #{single_frame_demo_encoder.1} parent=0 // pred_region
    _
  $region21: #{single_frame_demo_encoder.1} parent=0 // pred_fallthru
    _
  // Predicated region
  $region22: #{single_frame_demo_encoder.1} parent=0 // pred_check
    _
  $region23: #{single_frame_demo_encoder.1} parent=0 // pred_check_branch
    %23 = sbr.rel (0) target = $region25
  $region24: #{single_frame_demo_encoder.1} parent=0 // pred_region
    _
  $region25: #{single_frame_demo_encoder.1} parent=0 // pred_fallthru
    _
  // Predicated region
  $region26: #{single_frame_demo_encoder.1} parent=0 // pred_check
    _
  $region27: #{single_frame_demo_encoder.1} parent=0 // pred_check_branch
    %25 = sbr.rel (0) target = $region29
  $region28: #{single_frame_demo_encoder.1} parent=0 // pred_region
    _
  $region29: #{single_frame_demo_encoder.1} parent=0 // pred_fallthru
    _
  %p27 = scmp.eq.s32.totalorder 0, 0
  // Predicated region
  $region30: #{single_frame_demo_encoder.1} parent=0 // pred_check
    %p28 = pneg %p27
  $region31: #{single_frame_demo_encoder.1} parent=0 // pred_check_branch
    %30 = sbr.rel (%p28) target = $region33
  $region32: #{single_frame_demo_encoder.1} parent=0 // pred_region
    %31 = vst [vmem:[%s7] sm:$0xf] 0.0
  $region33: #{single_frame_demo_encoder.1} parent=0 // pred_fallthru
    _
  %v32 = vld [vmem:[%s0] sm:$0xff]
  %v33 = vld [vmem:[%s0 + $0x8] sm:$0xff]
  %v34 = vld [vmem:[%s0 + $0x10] sm:$0xff]
  %v35 = vld [vmem:[%s0 + $0x18] sm:$0xff]
  %v36 = vld [vmem:[%s0 + $0x20] sm:$0xff]
  %v37 = vld [vmem:[%s0 + $0x28] sm:$0xff]
  %v38 = vld [vmem:[%s0 + $0x30] sm:$0xff]
  %v39 = vld [vmem:[%s0 + $0x38] sm:$0xff]
  %v40 = vld [vmem:[%s0 + $0x40] sm:$0xff]
  %v41 = vld [vmem:[%s0 + $0x48] sm:$0xff]
  %v42 = vld [vmem:[%s0 + $0x50] sm:$0xff]
  %v43 = vld [vmem:[%s0 + $0x58] sm:$0xff]
  %v44 = vld [vmem:[%s0 + $0x60] sm:$0xff]
  %v45 = vld [vmem:[%s0 + $0x68] sm:$0xff]
  %v46 = vld [vmem:[%s0 + $0x70] sm:$0xff]
  %v47 = vld [vmem:[%s0 + $0x78] sm:$0xff]
  %v48 = vld [vmem:[%s0 + $0x80] sm:$0xff]
  %v49 = vld [vmem:[%s0 + $0x88] sm:$0xff]
  %v50 = vld [vmem:[%s0 + $0x90] sm:$0xff]
  %v51 = vld [vmem:[%s0 + $0x98] sm:$0xff]
  %v52 = vld [vmem:[%s0 + $0xa0] sm:$0xff]
  %v53 = vld [vmem:[%s0 + $0xa8] sm:$0xff]
  %v54 = vld [vmem:[%s0 + $0xb0] sm:$0xff]
  %v55 = vld [vmem:[%s0 + $0xb8] sm:$0xff]
  %v56 = vld [vmem:[%s0 + $0xc0] sm:$0xff]
  %v57 = vld [vmem:[%s0 + $0xc8] sm:$0xff]
  %v58 = vld [vmem:[%s0 + $0xd0] sm:$0xff]
  %v59 = vld [vmem:[%s0 + $0xd8] sm:$0xff]
  %v60 = vld [vmem:[%s0 + $0xe0] sm:$0xff]
  %v61 = vld [vmem:[%s0 + $0xe8] sm:$0xff]
  %v62 = vld [vmem:[%s0 + $0xf0] sm:$0xff]
  %v63 = vld [vmem:[%s0 + $0xf8] sm:$0xff]
  %v64 = vld [vmem:[%s1] sm:$0xf]
  %66 = vset.pattern.permute.xlu0 0
  %67 = vperm.xlu0 %66, %v32
  %v68 = vpop.permute.xlu0 %67
  %71 = vset.pattern.permute.xlu0 0
  %72 = vperm.xlu0 %71, %v33
  %v73 = vpop.permute.xlu0 %72
  %76 = vset.pattern.permute.xlu0 0
  %77 = vperm.xlu0 %76, %v34
  %v78 = vpop.permute.xlu0 %77
  %81 = vset.pattern.permute.xlu0 0
  %82 = vperm.xlu0 %81, %v35
  %v83 = vpop.permute.xlu0 %82
  %86 = vset.pattern.permute.xlu0 0
  %87 = vperm.xlu0 %86, %v36
  %v88 = vpop.permute.xlu0 %87
  %91 = vset.pattern.permute.xlu0 0
  %92 = vperm.xlu0 %91, %v37
  %v93 = vpop.permute.xlu0 %92
  %96 = vset.pattern.permute.xlu0 0
  %97 = vperm.xlu0 %96, %v38
  %v98 = vpop.permute.xlu0 %97
  %101 = vset.pattern.permute.xlu0 0
  %102 = vperm.xlu0 %101, %v39
  %v103 = vpop.permute.xlu0 %102
  %106 = vset.pattern.permute.xlu0 0
  %107 = vperm.xlu0 %106, %v40
  %v108 = vpop.permute.xlu0 %107
  %111 = vset.pattern.permute.xlu0 0
  %112 = vperm.xlu0 %111, %v41
  %v113 = vpop.permute.xlu0 %112
  %116 = vset.pattern.permute.xlu0 0
  %117 = vperm.xlu0 %116, %v42
  %v118 = vpop.permute.xlu0 %117
  %121 = vset.pattern.permute.xlu0 0
  %122 = vperm.xlu0 %121, %v43
  %v123 = vpop.permute.xlu0 %122
  %126 = vset.pattern.permute.xlu0 0
  %127 = vperm.xlu0 %126, %v44
  %v128 = vpop.permute.xlu0 %127
  %131 = vset.pattern.permute.xlu0 0
  %132 = vperm.xlu0 %131, %v45
  %v133 = vpop.permute.xlu0 %132
  %136 = vset.pattern.permute.xlu0 0
  %137 = vperm.xlu0 %136, %v46
  %v138 = vpop.permute.xlu0 %137
  %141 = vset.pattern.permute.xlu0 0
  %142 = vperm.xlu0 %141, %v47
  %v143 = vpop.permute.xlu0 %142
  %146 = vset.pattern.permute.xlu0 0
  %147 = vperm.xlu0 %146, %v48
  %v148 = vpop.permute.xlu0 %147
  %151 = vset.pattern.permute.xlu0 0
  %152 = vperm.xlu0 %151, %v49
  %v153 = vpop.permute.xlu0 %152
  %156 = vset.pattern.permute.xlu0 0
  %157 = vperm.xlu0 %156, %v50
  %v158 = vpop.permute.xlu0 %157
  %161 = vset.pattern.permute.xlu0 0
  %162 = vperm.xlu0 %161, %v51
  %v163 = vpop.permute.xlu0 %162
  %166 = vset.pattern.permute.xlu0 0
  %167 = vperm.xlu0 %166, %v52
  %v168 = vpop.permute.xlu0 %167
  %171 = vset.pattern.permute.xlu0 0
  %172 = vperm.xlu0 %171, %v53
  %v173 = vpop.permute.xlu0 %172
  %176 = vset.pattern.permute.xlu0 0
  %177 = vperm.xlu0 %176, %v54
  %v178 = vpop.permute.xlu0 %177
  %181 = vset.pattern.permute.xlu0 0
  %182 = vperm.xlu0 %181, %v55
  %v183 = vpop.permute.xlu0 %182
  %186 = vset.pattern.permute.xlu0 0
  %187 = vperm.xlu0 %186, %v56
  %v188 = vpop.permute.xlu0 %187
  %191 = vset.pattern.permute.xlu0 0
  %192 = vperm.xlu0 %191, %v57
  %v193 = vpop.permute.xlu0 %192
  %196 = vset.pattern.permute.xlu0 0
  %197 = vperm.xlu0 %196, %v58
  %v198 = vpop.permute.xlu0 %197
  %201 = vset.pattern.permute.xlu0 0
  %202 = vperm.xlu0 %201, %v59
  %v203 = vpop.permute.xlu0 %202
  %206 = vset.pattern.permute.xlu0 0
  %207 = vperm.xlu0 %206, %v60
  %v208 = vpop.permute.xlu0 %207
  %211 = vset.pattern.permute.xlu0 0
  %212 = vperm.xlu0 %211, %v61
  %v213 = vpop.permute.xlu0 %212
  %216 = vset.pattern.permute.xlu0 0
  %217 = vperm.xlu0 %216, %v62
  %v218 = vpop.permute.xlu0 %217
  %221 = vset.pattern.permute.xlu0 0
  %222 = vperm.xlu0 %221, %v63
  %v223 = vpop.permute.xlu0 %222
  %v225 = vlaneseq
  %v226 = vshrl.u32 %v225, 7
  %v227 = vsub.s32 0, %v226
  %v228 = vrot.slane %v64, %v227
  %v229 = vmul.f32 %v68, %v228
  %v230 = vmul.f32 %v73, %v228
  %v231 = vmul.f32 %v78, %v228
  %v232 = vmul.f32 %v83, %v228
  %v233 = vmul.f32 %v88, %v228
  %v234 = vmul.f32 %v93, %v228
  %v235 = vmul.f32 %v98, %v228
  %v236 = vmul.f32 %v103, %v228
  %v237 = vmul.f32 %v108, %v228
  %v238 = vmul.f32 %v113, %v228
  %v239 = vmul.f32 %v118, %v228
  %v240 = vmul.f32 %v123, %v228
  %v241 = vmul.f32 %v128, %v228
  %v242 = vmul.f32 %v133, %v228
  %v243 = vmul.f32 %v138, %v228
  %v244 = vmul.f32 %v143, %v228
  %v245 = vmul.f32 %v148, %v228
  %v246 = vmul.f32 %v153, %v228
  %v247 = vmul.f32 %v158, %v228
  %v248 = vmul.f32 %v163, %v228
  %v249 = vmul.f32 %v168, %v228
  %v250 = vmul.f32 %v173, %v228
  %v251 = vmul.f32 %v178, %v228
  %v252 = vmul.f32 %v183, %v228
  %v253 = vmul.f32 %v188, %v228
  %v254 = vmul.f32 %v193, %v228
  %v255 = vmul.f32 %v198, %v228
  %v256 = vmul.f32 %v203, %v228
  %v257 = vmul.f32 %v208, %v228
  %v258 = vmul.f32 %v213, %v228
  %v259 = vmul.f32 %v218, %v228
  %v260 = vmul.f32 %v223, %v228
  %v261 = vld [vmem:[%s2] sm:$0x1]
  %v263 = vlaneseq
  %v264 = vshrl.u32 %v263, 7
  %v265 = vsub.s32 0, %v264
  %v266 = vrot.slane %v261, %v265
  %v268 = vadd.f32 %v229, %v266
  %v269 = vadd.f32 %v230, %v266
  %v270 = vadd.f32 %v231, %v266
  %v271 = vadd.f32 %v232, %v266
  %v272 = vadd.f32 %v233, %v266
  %v273 = vadd.f32 %v234, %v266
  %v274 = vadd.f32 %v235, %v266
  %v275 = vadd.f32 %v236, %v266
  %v276 = vadd.f32 %v237, %v266
  %v277 = vadd.f32 %v238, %v266
  %v278 = vadd.f32 %v239, %v266
  %v279 = vadd.f32 %v240, %v266
  %v280 = vadd.f32 %v241, %v266
  %v281 = vadd.f32 %v242, %v266
  %v282 = vadd.f32 %v243, %v266
  %v283 = vadd.f32 %v244, %v266
  %v284 = vadd.f32 %v245, %v266
  %v285 = vadd.f32 %v246, %v266
  %v286 = vadd.f32 %v247, %v266
  %v287 = vadd.f32 %v248, %v266
  %v288 = vadd.f32 %v249, %v266
  %v289 = vadd.f32 %v250, %v266
  %v290 = vadd.f32 %v251, %v266
  %v291 = vadd.f32 %v252, %v266
  %v292 = vadd.f32 %v253, %v266
  %v293 = vadd.f32 %v254, %v266
  %v294 = vadd.f32 %v255, %v266
  %v295 = vadd.f32 %v256, %v266
  %v296 = vadd.f32 %v257, %v266
  %v297 = vadd.f32 %v258, %v266
  %v298 = vadd.f32 %v259, %v266
  %v299 = vadd.f32 %v260, %v266
  %300 = vset.pattern.permute.xlu0 1
  %301 = vperm.xlu0 %300, %v32
  %v302 = vpop.permute.xlu0 %301
  %304 = vset.pattern.permute.xlu0 1
  %305 = vperm.xlu0 %304, %v33
  %v306 = vpop.permute.xlu0 %305
  %308 = vset.pattern.permute.xlu0 1
  %309 = vperm.xlu0 %308, %v34
  %v310 = vpop.permute.xlu0 %309
  %312 = vset.pattern.permute.xlu0 1
  %313 = vperm.xlu0 %312, %v35
  %v314 = vpop.permute.xlu0 %313
  %316 = vset.pattern.permute.xlu0 1
  %317 = vperm.xlu0 %316, %v36
  %v318 = vpop.permute.xlu0 %317
  %320 = vset.pattern.permute.xlu0 1
  %321 = vperm.xlu0 %320, %v37
  %v322 = vpop.permute.xlu0 %321
  %324 = vset.pattern.permute.xlu0 1
  %325 = vperm.xlu0 %324, %v38
  %v326 = vpop.permute.xlu0 %325
  %328 = vset.pattern.permute.xlu0 1
  %329 = vperm.xlu0 %328, %v39
  %v330 = vpop.permute.xlu0 %329
  %332 = vset.pattern.permute.xlu0 1
  %333 = vperm.xlu0 %332, %v40
  %v334 = vpop.permute.xlu0 %333
  %336 = vset.pattern.permute.xlu0 1
  %337 = vperm.xlu0 %336, %v41
  %v338 = vpop.permute.xlu0 %337
  %340 = vset.pattern.permute.xlu0 1
  %341 = vperm.xlu0 %340, %v42
  %v342 = vpop.permute.xlu0 %341
  %344 = vset.pattern.permute.xlu0 1
  %345 = vperm.xlu0 %344, %v43
  %v346 = vpop.permute.xlu0 %345
  %348 = vset.pattern.permute.xlu0 1
  %349 = vperm.xlu0 %348, %v44
  %v350 = vpop.permute.xlu0 %349
  %352 = vset.pattern.permute.xlu0 1
  %353 = vperm.xlu0 %352, %v45
  %v354 = vpop.permute.xlu0 %353
  %356 = vset.pattern.permute.xlu0 1
  %357 = vperm.xlu0 %356, %v46
  %v358 = vpop.permute.xlu0 %357
  %360 = vset.pattern.permute.xlu0 1
  %361 = vperm.xlu0 %360, %v47
  %v362 = vpop.permute.xlu0 %361
  %364 = vset.pattern.permute.xlu0 1
  %365 = vperm.xlu0 %364, %v48
  %v366 = vpop.permute.xlu0 %365
  %368 = vset.pattern.permute.xlu0 1
  %369 = vperm.xlu0 %368, %v49
  %v370 = vpop.permute.xlu0 %369
  %372 = vset.pattern.permute.xlu0 1
  %373 = vperm.xlu0 %372, %v50
  %v374 = vpop.permute.xlu0 %373
  %376 = vset.pattern.permute.xlu0 1
  %377 = vperm.xlu0 %376, %v51
  %v378 = vpop.permute.xlu0 %377
  %380 = vset.pattern.permute.xlu0 1
  %381 = vperm.xlu0 %380, %v52
  %v382 = vpop.permute.xlu0 %381
  %384 = vset.pattern.permute.xlu0 1
  %385 = vperm.xlu0 %384, %v53
  %v386 = vpop.permute.xlu0 %385
  %388 = vset.pattern.permute.xlu0 1
  %389 = vperm.xlu0 %388, %v54
  %v390 = vpop.permute.xlu0 %389
  %392 = vset.pattern.permute.xlu0 1
  %393 = vperm.xlu0 %392, %v55
  %v394 = vpop.permute.xlu0 %393
  %396 = vset.pattern.permute.xlu0 1
  %397 = vperm.xlu0 %396, %v56
  %v398 = vpop.permute.xlu0 %397
  %400 = vset.pattern.permute.xlu0 1
  %401 = vperm.xlu0 %400, %v57
  %v402 = vpop.permute.xlu0 %401
  %404 = vset.pattern.permute.xlu0 1
  %405 = vperm.xlu0 %404, %v58
  %v406 = vpop.permute.xlu0 %405
  %408 = vset.pattern.permute.xlu0 1
  %409 = vperm.xlu0 %408, %v59
  %v410 = vpop.permute.xlu0 %409
  %412 = vset.pattern.permute.xlu0 1
  %413 = vperm.xlu0 %412, %v60
  %v414 = vpop.permute.xlu0 %413
  %416 = vset.pattern.permute.xlu0 1
  %417 = vperm.xlu0 %416, %v61
  %v418 = vpop.permute.xlu0 %417
  %420 = vset.pattern.permute.xlu0 1
  %421 = vperm.xlu0 %420, %v62
  %v422 = vpop.permute.xlu0 %421
  %424 = vset.pattern.permute.xlu0 1
  %425 = vperm.xlu0 %424, %v63
  %v426 = vpop.permute.xlu0 %425
  %v428 = vlaneseq
  %v429 = vshrl.u32 %v428, 7
  %v430 = vsub.s32 1, %v429
  %v431 = vrot.slane %v64, %v430
  %v432 = vmul.f32 %v302, %v431
  %v433 = vmul.f32 %v306, %v431
  %v434 = vmul.f32 %v310, %v431
  %v435 = vmul.f32 %v314, %v431
  %v436 = vmul.f32 %v318, %v431
  %v437 = vmul.f32 %v322, %v431
  %v438 = vmul.f32 %v326, %v431
  %v439 = vmul.f32 %v330, %v431
  %v440 = vmul.f32 %v334, %v431
  %v441 = vmul.f32 %v338, %v431
  %v442 = vmul.f32 %v342, %v431
  %v443 = vmul.f32 %v346, %v431
  %v444 = vmul.f32 %v350, %v431
  %v445 = vmul.f32 %v354, %v431
  %v446 = vmul.f32 %v358, %v431
  %v447 = vmul.f32 %v362, %v431
  %v448 = vmul.f32 %v366, %v431
  %v449 = vmul.f32 %v370, %v431
  %v450 = vmul.f32 %v374, %v431
  %v451 = vmul.f32 %v378, %v431
  %v452 = vmul.f32 %v382, %v431
  %v453 = vmul.f32 %v386, %v431
  %v454 = vmul.f32 %v390, %v431
  %v455 = vmul.f32 %v394, %v431
  %v456 = vmul.f32 %v398, %v431
  %v457 = vmul.f32 %v402, %v431
  %v458 = vmul.f32 %v406, %v431
  %v459 = vmul.f32 %v410, %v431
  %v460 = vmul.f32 %v414, %v431
  %v461 = vmul.f32 %v418, %v431
  %v462 = vmul.f32 %v422, %v431
  %v463 = vmul.f32 %v426, %v431
  %v464 = vadd.f32 %v268, %v432
  %v465 = vadd.f32 %v269, %v433
  %v466 = vadd.f32 %v270, %v434
  %v467 = vadd.f32 %v271, %v435
  %v468 = vadd.f32 %v272, %v436
  %v469 = vadd.f32 %v273, %v437
  %v470 = vadd.f32 %v274, %v438
  %v471 = vadd.f32 %v275, %v439
  %v472 = vadd.f32 %v276, %v440
  %v473 = vadd.f32 %v277, %v441
  %v474 = vadd.f32 %v278, %v442
  %v475 = vadd.f32 %v279, %v443
  %v476 = vadd.f32 %v280, %v444
  %v477 = vadd.f32 %v281, %v445
  %v478 = vadd.f32 %v282, %v446
  %v479 = vadd.f32 %v283, %v447
  %v480 = vadd.f32 %v284, %v448
  %v481 = vadd.f32 %v285, %v449
  %v482 = vadd.f32 %v286, %v450
  %v483 = vadd.f32 %v287, %v451
  %v484 = vadd.f32 %v288, %v452
  %v485 = vadd.f32 %v289, %v453
  %v486 = vadd.f32 %v290, %v454
  %v487 = vadd.f32 %v291, %v455
  %v488 = vadd.f32 %v292, %v456
  %v489 = vadd.f32 %v293, %v457
  %v490 = vadd.f32 %v294, %v458
  %v491 = vadd.f32 %v295, %v459
  %v492 = vadd.f32 %v296, %v460
  %v493 = vadd.f32 %v297, %v461
  %v494 = vadd.f32 %v298, %v462
  %v495 = vadd.f32 %v299, %v463
  %496 = vset.pattern.permute.xlu0 2
  %497 = vperm.xlu0 %496, %v32
  %v498 = vpop.permute.xlu0 %497
  %500 = vset.pattern.permute.xlu0 2
  %501 = vperm.xlu0 %500, %v33
  %v502 = vpop.permute.xlu0 %501
  %504 = vset.pattern.permute.xlu0 2
  %505 = vperm.xlu0 %504, %v34
  %v506 = vpop.permute.xlu0 %505
  %508 = vset.pattern.permute.xlu0 2
  %509 = vperm.xlu0 %508, %v35
  %v510 = vpop.permute.xlu0 %509
  %512 = vset.pattern.permute.xlu0 2
  %513 = vperm.xlu0 %512, %v36
  %v514 = vpop.permute.xlu0 %513
  %516 = vset.pattern.permute.xlu0 2
  %517 = vperm.xlu0 %516, %v37
  %v518 = vpop.permute.xlu0 %517
  %520 = vset.pattern.permute.xlu0 2
  %521 = vperm.xlu0 %520, %v38
  %v522 = vpop.permute.xlu0 %521
  %524 = vset.pattern.permute.xlu0 2
  %525 = vperm.xlu0 %524, %v39
  %v526 = vpop.permute.xlu0 %525
  %528 = vset.pattern.permute.xlu0 2
  %529 = vperm.xlu0 %528, %v40
  %v530 = vpop.permute.xlu0 %529
  %532 = vset.pattern.permute.xlu0 2
  %533 = vperm.xlu0 %532, %v41
  %v534 = vpop.permute.xlu0 %533
  %536 = vset.pattern.permute.xlu0 2
  %537 = vperm.xlu0 %536, %v42
  %v538 = vpop.permute.xlu0 %537
  %540 = vset.pattern.permute.xlu0 2
  %541 = vperm.xlu0 %540, %v43
  %v542 = vpop.permute.xlu0 %541
  %544 = vset.pattern.permute.xlu0 2
  %545 = vperm.xlu0 %544, %v44
  %v546 = vpop.permute.xlu0 %545
  %548 = vset.pattern.permute.xlu0 2
  %549 = vperm.xlu0 %548, %v45
  %v550 = vpop.permute.xlu0 %549
  %552 = vset.pattern.permute.xlu0 2
  %553 = vperm.xlu0 %552, %v46
  %v554 = vpop.permute.xlu0 %553
  %556 = vset.pattern.permute.xlu0 2
  %557 = vperm.xlu0 %556, %v47
  %v558 = vpop.permute.xlu0 %557
  %560 = vset.pattern.permute.xlu0 2
  %561 = vperm.xlu0 %560, %v48
  %v562 = vpop.permute.xlu0 %561
  %564 = vset.pattern.permute.xlu0 2
  %565 = vperm.xlu0 %564, %v49
  %v566 = vpop.permute.xlu0 %565
  %568 = vset.pattern.permute.xlu0 2
  %569 = vperm.xlu0 %568, %v50
  %v570 = vpop.permute.xlu0 %569
  %572 = vset.pattern.permute.xlu0 2
  %573 = vperm.xlu0 %572, %v51
  %v574 = vpop.permute.xlu0 %573
  %576 = vset.pattern.permute.xlu0 2
  %577 = vperm.xlu0 %576, %v52
  %v578 = vpop.permute.xlu0 %577
  %580 = vset.pattern.permute.xlu0 2
  %581 = vperm.xlu0 %580, %v53
  %v582 = vpop.permute.xlu0 %581
  %584 = vset.pattern.permute.xlu0 2
  %585 = vperm.xlu0 %584, %v54
  %v586 = vpop.permute.xlu0 %585
  %588 = vset.pattern.permute.xlu0 2
  %589 = vperm.xlu0 %588, %v55
  %v590 = vpop.permute.xlu0 %589
  %592 = vset.pattern.permute.xlu0 2
  %593 = vperm.xlu0 %592, %v56
  %v594 = vpop.permute.xlu0 %593
  %596 = vset.pattern.permute.xlu0 2
  %597 = vperm.xlu0 %596, %v57
  %v598 = vpop.permute.xlu0 %597
  %600 = vset.pattern.permute.xlu0 2
  %601 = vperm.xlu0 %600, %v58
  %v602 = vpop.permute.xlu0 %601
  %604 = vset.pattern.permute.xlu0 2
  %605 = vperm.xlu0 %604, %v59
  %v606 = vpop.permute.xlu0 %605
  %608 = vset.pattern.permute.xlu0 2
  %609 = vperm.xlu0 %608, %v60
  %v610 = vpop.permute.xlu0 %609
  %612 = vset.pattern.permute.xlu0 2
  %613 = vperm.xlu0 %612, %v61
  %v614 = vpop.permute.xlu0 %613
  %616 = vset.pattern.permute.xlu0 2
  %617 = vperm.xlu0 %616, %v62
  %v618 = vpop.permute.xlu0 %617
  %620 = vset.pattern.permute.xlu0 2
  %621 = vperm.xlu0 %620, %v63
  %v622 = vpop.permute.xlu0 %621
  %v624 = vlaneseq
  %v625 = vshrl.u32 %v624, 7
  %v626 = vsub.s32 2, %v625
  %v627 = vrot.slane %v64, %v626
  %v628 = vmul.f32 %v498, %v627
  %v629 = vmul.f32 %v502, %v627
  %v630 = vmul.f32 %v506, %v627
  %v631 = vmul.f32 %v510, %v627
  %v632 = vmul.f32 %v514, %v627
  %v633 = vmul.f32 %v518, %v627
  %v634 = vmul.f32 %v522, %v627
  %v635 = vmul.f32 %v526, %v627
  %v636 = vmul.f32 %v530, %v627
  %v637 = vmul.f32 %v534, %v627
  %v638 = vmul.f32 %v538, %v627
  %v639 = vmul.f32 %v542, %v627
  %v640 = vmul.f32 %v546, %v627
  %v641 = vmul.f32 %v550, %v627
  %v642 = vmul.f32 %v554, %v627
  %v643 = vmul.f32 %v558, %v627
  %v644 = vmul.f32 %v562, %v627
  %v645 = vmul.f32 %v566, %v627
  %v646 = vmul.f32 %v570, %v627
  %v647 = vmul.f32 %v574, %v627
  %v648 = vmul.f32 %v578, %v627
  %v649 = vmul.f32 %v582, %v627
  %v650 = vmul.f32 %v586, %v627
  %v651 = vmul.f32 %v590, %v627
  %v652 = vmul.f32 %v594, %v627
  %v653 = vmul.f32 %v598, %v627
  %v654 = vmul.f32 %v602, %v627
  %v655 = vmul.f32 %v606, %v627
  %v656 = vmul.f32 %v610, %v627
  %v657 = vmul.f32 %v614, %v627
  %v658 = vmul.f32 %v618, %v627
  %v659 = vmul.f32 %v622, %v627
  %v660 = vadd.f32 %v464, %v628
  %v661 = vadd.f32 %v465, %v629
  %v662 = vadd.f32 %v466, %v630
  %v663 = vadd.f32 %v467, %v631
  %v664 = vadd.f32 %v468, %v632
  %v665 = vadd.f32 %v469, %v633
  %v666 = vadd.f32 %v470, %v634
  %v667 = vadd.f32 %v471, %v635
  %v668 = vadd.f32 %v472, %v636
  %v669 = vadd.f32 %v473, %v637
  %v670 = vadd.f32 %v474, %v638
  %v671 = vadd.f32 %v475, %v639
  %v672 = vadd.f32 %v476, %v640
  %v673 = vadd.f32 %v477, %v641
  %v674 = vadd.f32 %v478, %v642
  %v675 = vadd.f32 %v479, %v643
  %v676 = vadd.f32 %v480, %v644
  %v677 = vadd.f32 %v481, %v645
  %v678 = vadd.f32 %v482, %v646
  %v679 = vadd.f32 %v483, %v647
  %v680 = vadd.f32 %v484, %v648
  %v681 = vadd.f32 %v485, %v649
  %v682 = vadd.f32 %v486, %v650
  %v683 = vadd.f32 %v487, %v651
  %v684 = vadd.f32 %v488, %v652
  %v685 = vadd.f32 %v489, %v653
  %v686 = vadd.f32 %v490, %v654
  %v687 = vadd.f32 %v491, %v655
  %v688 = vadd.f32 %v492, %v656
  %v689 = vadd.f32 %v493, %v657
  %v690 = vadd.f32 %v494, %v658
  %v691 = vadd.f32 %v495, %v659
  %692 = vset.pattern.permute.xlu0 3
  %693 = vperm.xlu0 %692, %v32
  %v694 = vpop.permute.xlu0 %693
  %696 = vset.pattern.permute.xlu0 3
  %697 = vperm.xlu0 %696, %v33
  %v698 = vpop.permute.xlu0 %697
  %700 = vset.pattern.permute.xlu0 3
  %701 = vperm.xlu0 %700, %v34
  %v702 = vpop.permute.xlu0 %701
  %704 = vset.pattern.permute.xlu0 3
  %705 = vperm.xlu0 %704, %v35
  %v706 = vpop.permute.xlu0 %705
  %708 = vset.pattern.permute.xlu0 3
  %709 = vperm.xlu0 %708, %v36
  %v710 = vpop.permute.xlu0 %709
  %712 = vset.pattern.permute.xlu0 3
  %713 = vperm.xlu0 %712, %v37
  %v714 = vpop.permute.xlu0 %713
  %716 = vset.pattern.permute.xlu0 3
  %717 = vperm.xlu0 %716, %v38
  %v718 = vpop.permute.xlu0 %717
  %720 = vset.pattern.permute.xlu0 3
  %721 = vperm.xlu0 %720, %v39
  %v722 = vpop.permute.xlu0 %721
  %724 = vset.pattern.permute.xlu0 3
  %725 = vperm.xlu0 %724, %v40
  %v726 = vpop.permute.xlu0 %725
  %728 = vset.pattern.permute.xlu0 3
  %729 = vperm.xlu0 %728, %v41
  %v730 = vpop.permute.xlu0 %729
  %732 = vset.pattern.permute.xlu0 3
  %733 = vperm.xlu0 %732, %v42
  %v734 = vpop.permute.xlu0 %733
  %736 = vset.pattern.permute.xlu0 3
  %737 = vperm.xlu0 %736, %v43
  %v738 = vpop.permute.xlu0 %737
  %740 = vset.pattern.permute.xlu0 3
  %741 = vperm.xlu0 %740, %v44
  %v742 = vpop.permute.xlu0 %741
  %744 = vset.pattern.permute.xlu0 3
  %745 = vperm.xlu0 %744, %v45
  %v746 = vpop.permute.xlu0 %745
  %748 = vset.pattern.permute.xlu0 3
  %749 = vperm.xlu0 %748, %v46
  %v750 = vpop.permute.xlu0 %749
  %752 = vset.pattern.permute.xlu0 3
  %753 = vperm.xlu0 %752, %v47
  %v754 = vpop.permute.xlu0 %753
  %756 = vset.pattern.permute.xlu0 3
  %757 = vperm.xlu0 %756, %v48
  %v758 = vpop.permute.xlu0 %757
  %760 = vset.pattern.permute.xlu0 3
  %761 = vperm.xlu0 %760, %v49
  %v762 = vpop.permute.xlu0 %761
  %764 = vset.pattern.permute.xlu0 3
  %765 = vperm.xlu0 %764, %v50
  %v766 = vpop.permute.xlu0 %765
  %768 = vset.pattern.permute.xlu0 3
  %769 = vperm.xlu0 %768, %v51
  %v770 = vpop.permute.xlu0 %769
  %772 = vset.pattern.permute.xlu0 3
  %773 = vperm.xlu0 %772, %v52
  %v774 = vpop.permute.xlu0 %773
  %776 = vset.pattern.permute.xlu0 3
  %777 = vperm.xlu0 %776, %v53
  %v778 = vpop.permute.xlu0 %777
  %780 = vset.pattern.permute.xlu0 3
  %781 = vperm.xlu0 %780, %v54
  %v782 = vpop.permute.xlu0 %781
  %784 = vset.pattern.permute.xlu0 3
  %785 = vperm.xlu0 %784, %v55
  %v786 = vpop.permute.xlu0 %785
  %788 = vset.pattern.permute.xlu0 3
  %789 = vperm.xlu0 %788, %v56
  %v790 = vpop.permute.xlu0 %789
  %792 = vset.pattern.permute.xlu0 3
  %793 = vperm.xlu0 %792, %v57
  %v794 = vpop.permute.xlu0 %793
  %796 = vset.pattern.permute.xlu0 3
  %797 = vperm.xlu0 %796, %v58
  %v798 = vpop.permute.xlu0 %797
  %800 = vset.pattern.permute.xlu0 3
  %801 = vperm.xlu0 %800, %v59
  %v802 = vpop.permute.xlu0 %801
  %804 = vset.pattern.permute.xlu0 3
  %805 = vperm.xlu0 %804, %v60
  %v806 = vpop.permute.xlu0 %805
  %808 = vset.pattern.permute.xlu0 3
  %809 = vperm.xlu0 %808, %v61
  %v810 = vpop.permute.xlu0 %809
  %812 = vset.pattern.permute.xlu0 3
  %813 = vperm.xlu0 %812, %v62
  %v814 = vpop.permute.xlu0 %813
  %816 = vset.pattern.permute.xlu0 3
  %817 = vperm.xlu0 %816, %v63
  %v818 = vpop.permute.xlu0 %817
  %v820 = vlaneseq
  %v821 = vshrl.u32 %v820, 7
  %v822 = vsub.s32 3, %v821
  %v823 = vrot.slane %v64, %v822
  %v824 = vmul.f32 %v694, %v823
  %v825 = vmul.f32 %v698, %v823
  %v826 = vmul.f32 %v702, %v823
  %v827 = vmul.f32 %v706, %v823
  %v828 = vmul.f32 %v710, %v823
  %v829 = vmul.f32 %v714, %v823
  %v830 = vmul.f32 %v718, %v823
  %v831 = vmul.f32 %v722, %v823
  %v832 = vmul.f32 %v726, %v823
  %v833 = vmul.f32 %v730, %v823
  %v834 = vmul.f32 %v734, %v823
  %v835 = vmul.f32 %v738, %v823
  %v836 = vmul.f32 %v742, %v823
  %v837 = vmul.f32 %v746, %v823
  %v838 = vmul.f32 %v750, %v823
  %v839 = vmul.f32 %v754, %v823
  %v840 = vmul.f32 %v758, %v823
  %v841 = vmul.f32 %v762, %v823
  %v842 = vmul.f32 %v766, %v823
  %v843 = vmul.f32 %v770, %v823
  %v844 = vmul.f32 %v774, %v823
  %v845 = vmul.f32 %v778, %v823
  %v846 = vmul.f32 %v782, %v823
  %v847 = vmul.f32 %v786, %v823
  %v848 = vmul.f32 %v790, %v823
  %v849 = vmul.f32 %v794, %v823
  %v850 = vmul.f32 %v798, %v823
  %v851 = vmul.f32 %v802, %v823
  %v852 = vmul.f32 %v806, %v823
  %v853 = vmul.f32 %v810, %v823
  %v854 = vmul.f32 %v814, %v823
  %v855 = vmul.f32 %v818, %v823
  %v856 = vadd.f32 %v660, %v824
  %v857 = vadd.f32 %v661, %v825
  %v858 = vadd.f32 %v662, %v826
  %v859 = vadd.f32 %v663, %v827
  %v860 = vadd.f32 %v664, %v828
  %v861 = vadd.f32 %v665, %v829
  %v862 = vadd.f32 %v666, %v830
  %v863 = vadd.f32 %v667, %v831
  %v864 = vadd.f32 %v668, %v832
  %v865 = vadd.f32 %v669, %v833
  %v866 = vadd.f32 %v670, %v834
  %v867 = vadd.f32 %v671, %v835
  %v868 = vadd.f32 %v672, %v836
  %v869 = vadd.f32 %v673, %v837
  %v870 = vadd.f32 %v674, %v838
  %v871 = vadd.f32 %v675, %v839
  %v872 = vadd.f32 %v676, %v840
  %v873 = vadd.f32 %v677, %v841
  %v874 = vadd.f32 %v678, %v842
  %v875 = vadd.f32 %v679, %v843
  %v876 = vadd.f32 %v680, %v844
  %v877 = vadd.f32 %v681, %v845
  %v878 = vadd.f32 %v682, %v846
  %v879 = vadd.f32 %v683, %v847
  %v880 = vadd.f32 %v684, %v848
  %v881 = vadd.f32 %v685, %v849
  %v882 = vadd.f32 %v686, %v850
  %v883 = vadd.f32 %v687, %v851
  %v884 = vadd.f32 %v688, %v852
  %v885 = vadd.f32 %v689, %v853
  %v886 = vadd.f32 %v690, %v854
  %v887 = vadd.f32 %v691, %v855
  %v888 = vmax.f32 %v856, 0.0
  %v889 = vmax.f32 %v857, 0.0
  %v890 = vmax.f32 %v858, 0.0
  %v891 = vmax.f32 %v859, 0.0
  %v892 = vmax.f32 %v860, 0.0
  %v893 = vmax.f32 %v861, 0.0
  %v894 = vmax.f32 %v862, 0.0
  %v895 = vmax.f32 %v863, 0.0
  %v896 = vmax.f32 %v864, 0.0
  %v897 = vmax.f32 %v865, 0.0
  %v898 = vmax.f32 %v866, 0.0
  %v899 = vmax.f32 %v867, 0.0
  %v900 = vmax.f32 %v868, 0.0
  %v901 = vmax.f32 %v869, 0.0
  %v902 = vmax.f32 %v870, 0.0
  %v903 = vmax.f32 %v871, 0.0
  %v904 = vmax.f32 %v872, 0.0
  %v905 = vmax.f32 %v873, 0.0
  %v906 = vmax.f32 %v874, 0.0
  %v907 = vmax.f32 %v875, 0.0
  %v908 = vmax.f32 %v876, 0.0
  %v909 = vmax.f32 %v877, 0.0
  %v910 = vmax.f32 %v878, 0.0
  %v911 = vmax.f32 %v879, 0.0
  %v912 = vmax.f32 %v880, 0.0
  %v913 = vmax.f32 %v881, 0.0
  %v914 = vmax.f32 %v882, 0.0
  %v915 = vmax.f32 %v883, 0.0
  %v916 = vmax.f32 %v884, 0.0
  %v917 = vmax.f32 %v885, 0.0
  %v918 = vmax.f32 %v886, 0.0
  %v919 = vmax.f32 %v887, 0.0
  %v920 = vpack.c.bf16 %v889, %v888
  %v921 = vpack.c.bf16 %v891, %v890
  %v922 = vpack.c.bf16 %v893, %v892
  %v923 = vpack.c.bf16 %v895, %v894
  %v924 = vpack.c.bf16 %v897, %v896
  %v925 = vpack.c.bf16 %v899, %v898
  %v926 = vpack.c.bf16 %v901, %v900
  %v927 = vpack.c.bf16 %v903, %v902
  %v928 = vpack.c.bf16 %v905, %v904
  %v929 = vpack.c.bf16 %v907, %v906
  %v930 = vpack.c.bf16 %v909, %v908
  %v931 = vpack.c.bf16 %v911, %v910
  %v932 = vpack.c.bf16 %v913, %v912
  %v933 = vpack.c.bf16 %v915, %v914
  %v934 = vpack.c.bf16 %v917, %v916
  %v935 = vpack.c.bf16 %v919, %v918
  %v936 = vld [vmem:[%s3] sm:$0xf]
  %v937 = vld [vmem:[%s3 + $0x4] sm:$0xf]
  %v938 = vld [vmem:[%s3 + $0x8] sm:$0xf]
  %v939 = vld [vmem:[%s3 + $0xc] sm:$0xf]
  %v940 = vld [vmem:[%s3 + $0x10] sm:$0xf]
  %v941 = vld [vmem:[%s3 + $0x14] sm:$0xf]
  %v942 = vld [vmem:[%s3 + $0x18] sm:$0xf]
  %v943 = vld [vmem:[%s3 + $0x1c] sm:$0xf]
  %v944 = vld [vmem:[%s4] sm:$0x1]
  %v946 = vlaneseq
  %v947 = vshrl.u32 %v946, 7
  %v948 = vsub.s32 0, %v947
  %v949 = vrot.slane %v944, %v948
  %v959 = vunpack.c.l.b16 %v936
  %v960 = vunpack.c.l.b16 %v937
  %v961 = vunpack.c.l.b16 %v938
  %v962 = vunpack.c.l.b16 %v939
  %v963 = vunpack.c.l.b16 %v940
  %v964 = vunpack.c.l.b16 %v941
  %v965 = vunpack.c.l.b16 %v942
  %v966 = vunpack.c.l.b16 %v943
  %v967 = vpack.c.b16 %v960, %v959
  %v968 = vpack.c.b16 %v962, %v961
  %v969 = vpack.c.b16 %v964, %v963
  %v970 = vpack.c.b16 %v966, %v965
  %vm975 = vcmask 523264
  %v977 = vsel %vm975, %v920, 0
  %v980 = vsel %vm975, %v921, 0
  %v983 = vsel %vm975, %v922, 0
  %v986 = vsel %vm975, %v923, 0
  %v989 = vsel %vm975, %v924, 0
  %v992 = vsel %vm975, %v925, 0
  %v995 = vsel %vm975, %v926, 0
  %v998 = vsel %vm975, %v927, 0
  %v1001 = vsel %vm975, %v928, 0
  %v1004 = vsel %vm975, %v929, 0
  %v1007 = vsel %vm975, %v930, 0
  %v1010 = vsel %vm975, %v931, 0
  %v1013 = vsel %vm975, %v932, 0
  %v1016 = vsel %vm975, %v933, 0
  %v1019 = vsel %vm975, %v934, 0
  %v1022 = vsel %vm975, %v935, 0
  %1024 = vmatprep.subr.bf16.mxu0 0
  %1025 = vmatpush1.bf16.msra.mxu0 %v967
  %1026 = vmatprep.subr.bf16.mxu0 0
  %1027 = vmatpush1.bf16.msra.mxu0 %v968
  %1028 = vmatprep.subr.bf16.mxu0 0
  %1029 = vmatpush1.bf16.msra.mxu0 %v969
  %1030 = vmatprep.subr.bf16.mxu0 0
  %1031 = vmatpush1.bf16.msra.mxu0 %v970
  %1032 = vmatprep.subr.bf16.mxu0 0
  %1033 = vmatpush1.bf16.msra.mxu0 0
  %1034 = vmatprep.subr.bf16.mxu0 0
  %1035 = vmatpush1.bf16.msra.mxu0 0
  %1036 = vmatprep.subr.bf16.mxu0 0
  %1037 = vmatpush1.bf16.msra.mxu0 0
  %1038 = vmatprep.subr.bf16.mxu0 0
  %1039 = vmatpush1.bf16.msra.mxu0 0
  %1040 = vmatprep.subr.bf16.mxu0 0
  %1041 = vmatpush1.bf16.msra.mxu0 0
  %1042 = vmatprep.subr.bf16.mxu0 0
  %1043 = vmatpush1.bf16.msra.mxu0 0
  %1044 = vmatprep.subr.bf16.mxu0 0
  %1045 = vmatpush1.bf16.msra.mxu0 0
  %1046 = vmatprep.subr.bf16.mxu0 0
  %1047 = vmatpush1.bf16.msra.mxu0 0
  %1048 = vmatprep.subr.bf16.mxu0 0
  %1049 = vmatpush1.bf16.msra.mxu0 0
  %1050 = vmatprep.subr.bf16.mxu0 0
  %1051 = vmatpush1.bf16.msra.mxu0 0
  %1052 = vmatprep.subr.bf16.mxu0 0
  %1053 = vmatpush1.bf16.msra.mxu0 0
  %1054 = vmatprep.subr.bf16.mxu0 0
  %1055 = vmatpush1.bf16.msra.mxu0 0
  %1056 = vmatprep.mubr.bf16.mxu0 0
  %1057 = vmatmul.mubr.bf16.gmra.mrb[0].mxu0 %v977
  %v1058 = vpop.f32.mrb[0].mxu0
  %v1059 = vadd.f32 %v949, %v1058
  %v1060 = vpop.f32.mrb[0].mxu0
  %v1061 = vpop.f32.mrb[0].mxu0
  %v1062 = vadd.f32 %v949, %v1061
  %v1063 = vpop.f32.mrb[0].mxu0
  %1064 = vmatprep.mubr.bf16.mxu0 0
  %1065 = vmatmul.mubr.bf16.gmra.mrb[0].mxu0 %v980
  %v1066 = vpop.f32.mrb[0].mxu0
  %v1067 = vadd.f32 %v949, %v1066
  %v1068 = vpop.f32.mrb[0].mxu0
  %v1069 = vpop.f32.mrb[0].mxu0
  %v1070 = vadd.f32 %v949, %v1069
  %v1071 = vpop.f32.mrb[0].mxu0
  %1072 = vmatprep.mubr.bf16.mxu0 0
  %1073 = vmatmul.mubr.bf16.gmra.mrb[0].mxu0 %v983
  %v1074 = vpop.f32.mrb[0].mxu0
  %v1075 = vadd.f32 %v949, %v1074
  %v1076 = vpop.f32.mrb[0].mxu0
  %v1077 = vpop.f32.mrb[0].mxu0
  %v1078 = vadd.f32 %v949, %v1077
  %v1079 = vpop.f32.mrb[0].mxu0
  %1080 = vmatprep.mubr.bf16.mxu0 0
  %1081 = vmatmul.mubr.bf16.gmra.mrb[0].mxu0 %v986
  %v1082 = vpop.f32.mrb[0].mxu0
  %v1083 = vadd.f32 %v949, %v1082
  %v1084 = vpop.f32.mrb[0].mxu0
  %v1085 = vpop.f32.mrb[0].mxu0
  %v1086 = vadd.f32 %v949, %v1085
  %v1087 = vpop.f32.mrb[0].mxu0
  %1088 = vmatprep.mubr.bf16.mxu0 0
  %1089 = vmatmul.mubr.bf16.gmra.mrb[0].mxu0 %v989
  %v1090 = vpop.f32.mrb[0].mxu0
  %v1091 = vadd.f32 %v949, %v1090
  %v1092 = vpop.f32.mrb[0].mxu0
  %v1093 = vpop.f32.mrb[0].mxu0
  %v1094 = vadd.f32 %v949, %v1093
  %v1095 = vpop.f32.mrb[0].mxu0
  %1096 = vmatprep.mubr.bf16.mxu0 0
  %1097 = vmatmul.mubr.bf16.gmra.mrb[0].mxu0 %v992
  %v1098 = vpop.f32.mrb[0].mxu0
  %v1099 = vadd.f32 %v949, %v1098
  %v1100 = vpop.f32.mrb[0].mxu0
  %v1101 = vpop.f32.mrb[0].mxu0
  %v1102 = vadd.f32 %v949, %v1101
  %v1103 = vpop.f32.mrb[0].mxu0
  %1104 = vmatprep.mubr.bf16.mxu0 0
  %1105 = vmatmul.mubr.bf16.gmra.mrb[0].mxu0 %v995
  %v1106 = vpop.f32.mrb[0].mxu0
  %v1107 = vadd.f32 %v949, %v1106
  %v1108 = vpop.f32.mrb[0].mxu0
  %v1109 = vpop.f32.mrb[0].mxu0
  %v1110 = vadd.f32 %v949, %v1109
  %v1111 = vpop.f32.mrb[0].mxu0
  %1112 = vmatprep.mubr.bf16.mxu0 0
  %1113 = vmatmul.mubr.bf16.gmra.mrb[0].mxu0 %v998
  %v1114 = vpop.f32.mrb[0].mxu0
  %v1115 = vadd.f32 %v949, %v1114
  %v1116 = vpop.f32.mrb[0].mxu0
  %v1117 = vpop.f32.mrb[0].mxu0
  %v1118 = vadd.f32 %v949, %v1117
  %v1119 = vpop.f32.mrb[0].mxu0
  %1120 = vmatprep.mubr.bf16.mxu0 0
  %1121 = vmatmul.mubr.bf16.gmra.mrb[0].mxu0 %v1001
  %v1122 = vpop.f32.mrb[0].mxu0
  %v1123 = vadd.f32 %v949, %v1122
  %v1124 = vpop.f32.mrb[0].mxu0
  %v1125 = vpop.f32.mrb[0].mxu0
  %v1126 = vadd.f32 %v949, %v1125
  %v1127 = vpop.f32.mrb[0].mxu0
  %1128 = vmatprep.mubr.bf16.mxu0 0
  %1129 = vmatmul.mubr.bf16.gmra.mrb[0].mxu0 %v1004
  %v1130 = vpop.f32.mrb[0].mxu0
  %v1131 = vadd.f32 %v949, %v1130
  %v1132 = vpop.f32.mrb[0].mxu0
  %v1133 = vpop.f32.mrb[0].mxu0
  %v1134 = vadd.f32 %v949, %v1133
  %v1135 = vpop.f32.mrb[0].mxu0
  %1136 = vmatprep.mubr.bf16.mxu0 0
  %1137 = vmatmul.mubr.bf16.gmra.mrb[0].mxu0 %v1007
  %v1138 = vpop.f32.mrb[0].mxu0
  %v1139 = vadd.f32 %v949, %v1138
  %v1140 = vpop.f32.mrb[0].mxu0
  %v1141 = vpop.f32.mrb[0].mxu0
  %v1142 = vadd.f32 %v949, %v1141
  %v1143 = vpop.f32.mrb[0].mxu0
  %1144 = vmatprep.mubr.bf16.mxu0 0
  %1145 = vmatmul.mubr.bf16.gmra.mrb[0].mxu0 %v1010
  %v1146 = vpop.f32.mrb[0].mxu0
  %v1147 = vadd.f32 %v949, %v1146
  %v1148 = vpop.f32.mrb[0].mxu0
  %v1149 = vpop.f32.mrb[0].mxu0
  %v1150 = vadd.f32 %v949, %v1149
  %v1151 = vpop.f32.mrb[0].mxu0
  %1152 = vmatprep.mubr.bf16.mxu0 0
  %1153 = vmatmul.mubr.bf16.gmra.mrb[0].mxu0 %v1013
  %v1154 = vpop.f32.mrb[0].mxu0
  %v1155 = vadd.f32 %v949, %v1154
  %v1156 = vpop.f32.mrb[0].mxu0
  %v1157 = vpop.f32.mrb[0].mxu0
  %v1158 = vadd.f32 %v949, %v1157
  %v1159 = vpop.f32.mrb[0].mxu0
  %1160 = vmatprep.mubr.bf16.mxu0 0
  %1161 = vmatmul.mubr.bf16.gmra.mrb[0].mxu0 %v1016
  %v1162 = vpop.f32.mrb[0].mxu0
  %v1163 = vadd.f32 %v949, %v1162
  %v1164 = vpop.f32.mrb[0].mxu0
  %v1165 = vpop.f32.mrb[0].mxu0
  %v1166 = vadd.f32 %v949, %v1165
  %v1167 = vpop.f32.mrb[0].mxu0
  %1168 = vmatprep.mubr.bf16.mxu0 0
  %1169 = vmatmul.mubr.bf16.gmra.mrb[0].mxu0 %v1019
  %v1170 = vpop.f32.mrb[0].mxu0
  %v1171 = vadd.f32 %v949, %v1170
  %v1172 = vpop.f32.mrb[0].mxu0
  %v1173 = vpop.f32.mrb[0].mxu0
  %v1174 = vadd.f32 %v949, %v1173
  %v1175 = vpop.f32.mrb[0].mxu0
  %1176 = vmatprep.mubr.bf16.mxu0 0
  %1177 = vmatmul.mubr.bf16.gmra.mrb[0].mxu0 %v1022
  %v1178 = vpop.f32.mrb[0].mxu0
  %v1179 = vadd.f32 %v949, %v1178
  %v1180 = vpop.f32.mrb[0].mxu0
  %v1181 = vpop.f32.mrb[0].mxu0
  %v1182 = vadd.f32 %v949, %v1181
  %v1183 = vpop.f32.mrb[0].mxu0
  %1184 = vdwg.mxu0
  %v1185 = vmax.f32 %v1059, 0.0
  %v1186 = vmax.f32 %v1062, 0.0
  %v1187 = vmax.f32 %v1067, 0.0
  %v1188 = vmax.f32 %v1070, 0.0
  %v1189 = vmax.f32 %v1075, 0.0
  %v1190 = vmax.f32 %v1078, 0.0
  %v1191 = vmax.f32 %v1083, 0.0
  %v1192 = vmax.f32 %v1086, 0.0
  %v1193 = vmax.f32 %v1091, 0.0
  %v1194 = vmax.f32 %v1094, 0.0
  %v1195 = vmax.f32 %v1099, 0.0
  %v1196 = vmax.f32 %v1102, 0.0
  %v1197 = vmax.f32 %v1107, 0.0
  %v1198 = vmax.f32 %v1110, 0.0
  %v1199 = vmax.f32 %v1115, 0.0
  %v1200 = vmax.f32 %v1118, 0.0
  %v1201 = vmax.f32 %v1123, 0.0
  %v1202 = vmax.f32 %v1126, 0.0
  %v1203 = vmax.f32 %v1131, 0.0
  %v1204 = vmax.f32 %v1134, 0.0
  %v1205 = vmax.f32 %v1139, 0.0
  %v1206 = vmax.f32 %v1142, 0.0
  %v1207 = vmax.f32 %v1147, 0.0
  %v1208 = vmax.f32 %v1150, 0.0
  %v1209 = vmax.f32 %v1155, 0.0
  %v1210 = vmax.f32 %v1158, 0.0
  %v1211 = vmax.f32 %v1163, 0.0
  %v1212 = vmax.f32 %v1166, 0.0
  %v1213 = vmax.f32 %v1171, 0.0
  %v1214 = vmax.f32 %v1174, 0.0
  %v1215 = vmax.f32 %v1179, 0.0
  %v1216 = vmax.f32 %v1182, 0.0
  %v1217 = vpack.c.bf16 %v1186, %v1185
  %v1218 = vpack.c.bf16 %v1188, %v1187
  %v1219 = vpack.c.bf16 %v1190, %v1189
  %v1220 = vpack.c.bf16 %v1192, %v1191
  %v1221 = vpack.c.bf16 %v1194, %v1193
  %v1222 = vpack.c.bf16 %v1196, %v1195
  %v1223 = vpack.c.bf16 %v1198, %v1197
  %v1224 = vpack.c.bf16 %v1200, %v1199
  %v1225 = vpack.c.bf16 %v1202, %v1201
  %v1226 = vpack.c.bf16 %v1204, %v1203
  %v1227 = vpack.c.bf16 %v1206, %v1205
  %v1228 = vpack.c.bf16 %v1208, %v1207
  %v1229 = vpack.c.bf16 %v1210, %v1209
  %v1230 = vpack.c.bf16 %v1212, %v1211
  %v1231 = vpack.c.bf16 %v1214, %v1213
  %v1232 = vpack.c.bf16 %v1216, %v1215
  %v1233 = vld [vmem:[%s5] sm:$0xff]
  %v1234 = vld [vmem:[%s5 + $0x8] sm:$0xff]
  %v1235 = vld [vmem:[%s5 + $0x10] sm:$0xff]
  %v1236 = vld [vmem:[%s5 + $0x18] sm:$0xff]
  %v1237 = vld [vmem:[%s5 + $0x20] sm:$0xff]
  %v1238 = vld [vmem:[%s5 + $0x28] sm:$0xff]
  %v1239 = vld [vmem:[%s5 + $0x30] sm:$0xff]
  %v1240 = vld [vmem:[%s5 + $0x38] sm:$0xff]
  %v1241 = vld [vmem:[%s5 + $0x40] sm:$0xff]
  %v1242 = vld [vmem:[%s5 + $0x48] sm:$0xff]
  %v1243 = vld [vmem:[%s5 + $0x50] sm:$0xff]
  %v1244 = vld [vmem:[%s5 + $0x58] sm:$0xff]
  %v1245 = vld [vmem:[%s5 + $0x60] sm:$0xff]
  %v1246 = vld [vmem:[%s5 + $0x68] sm:$0xff]
  %v1247 = vld [vmem:[%s5 + $0x70] sm:$0xff]
  %v1248 = vld [vmem:[%s5 + $0x78] sm:$0xff]
  %v1249 = vld [vmem:[%s6] sm:$0x3]
  %v1251 = vlaneseq
  %v1252 = vshrl.u32 %v1251, 7
  %v1253 = vsub.s32 0, %v1252
  %v1254 = vrot.slane %v1249, %v1253
  %v1255 = vlaneseq
  %v1256 = vshrl.u32 %v1255, 7
  %v1257 = vsub.s32 1, %v1256
  %v1258 = vrot.slane %v1249, %v1257
  %v1277 = vunpack.c.l.b16 %v1233
  %v1278 = vunpack.c.h.b16 %v1233
  %v1279 = vunpack.c.l.b16 %v1234
  %v1280 = vunpack.c.h.b16 %v1234
  %v1281 = vunpack.c.l.b16 %v1235
  %v1282 = vunpack.c.h.b16 %v1235
  %v1283 = vunpack.c.l.b16 %v1236
  %v1284 = vunpack.c.h.b16 %v1236
  %v1285 = vunpack.c.l.b16 %v1237
  %v1286 = vunpack.c.h.b16 %v1237
  %v1287 = vunpack.c.l.b16 %v1238
  %v1288 = vunpack.c.h.b16 %v1238
  %v1289 = vunpack.c.l.b16 %v1239
  %v1290 = vunpack.c.h.b16 %v1239
  %v1291 = vunpack.c.l.b16 %v1240
  %v1292 = vunpack.c.h.b16 %v1240
  %v1293 = vunpack.c.l.b16 %v1241
  %v1294 = vunpack.c.h.b16 %v1241
  %v1295 = vunpack.c.l.b16 %v1242
  %v1296 = vunpack.c.h.b16 %v1242
  %v1297 = vunpack.c.l.b16 %v1243
  %v1298 = vunpack.c.h.b16 %v1243
  %v1299 = vunpack.c.l.b16 %v1244
  %v1300 = vunpack.c.h.b16 %v1244
  %v1301 = vunpack.c.l.b16 %v1245
  %v1302 = vunpack.c.h.b16 %v1245
  %v1303 = vunpack.c.l.b16 %v1246
  %v1304 = vunpack.c.h.b16 %v1246
  %v1305 = vunpack.c.l.b16 %v1247
  %v1306 = vunpack.c.h.b16 %v1247
  %v1307 = vunpack.c.l.b16 %v1248
  %v1308 = vunpack.c.h.b16 %v1248
  %v1309 = vpack.c.b16 %v1279, %v1277
  %v1310 = vpack.c.b16 %v1280, %v1278
  %v1311 = vpack.c.b16 %v1283, %v1281
  %v1312 = vpack.c.b16 %v1284, %v1282
  %v1313 = vpack.c.b16 %v1287, %v1285
  %v1314 = vpack.c.b16 %v1288, %v1286
  %v1315 = vpack.c.b16 %v1291, %v1289
  %v1316 = vpack.c.b16 %v1292, %v1290
  %v1317 = vpack.c.b16 %v1295, %v1293
  %v1318 = vpack.c.b16 %v1296, %v1294
  %v1319 = vpack.c.b16 %v1299, %v1297
  %v1320 = vpack.c.b16 %v1300, %v1298
  %v1321 = vpack.c.b16 %v1303, %v1301
  %v1322 = vpack.c.b16 %v1304, %v1302
  %v1323 = vpack.c.b16 %v1307, %v1305
  %v1324 = vpack.c.b16 %v1308, %v1306
  %1341 = vmatprep.subr.bf16.mxu0 %v1310
  %1342 = vmatpush1.bf16.msra.mxu0 %v1309
  %1343 = vmatprep.subr.bf16.mxu0 %v1312
  %1344 = vmatpush1.bf16.msra.mxu0 %v1311
  %1345 = vmatprep.subr.bf16.mxu0 %v1314
  %1346 = vmatpush1.bf16.msra.mxu0 %v1313
  %1347 = vmatprep.subr.bf16.mxu0 %v1316
  %1348 = vmatpush1.bf16.msra.mxu0 %v1315
  %1349 = vmatprep.subr.bf16.mxu0 %v1318
  %1350 = vmatpush1.bf16.msra.mxu0 %v1317
  %1351 = vmatprep.subr.bf16.mxu0 %v1320
  %1352 = vmatpush1.bf16.msra.mxu0 %v1319
  %1353 = vmatprep.subr.bf16.mxu0 %v1322
  %1354 = vmatpush1.bf16.msra.mxu0 %v1321
  %1355 = vmatprep.subr.bf16.mxu0 %v1324
  %1356 = vmatpush1.bf16.msra.mxu0 %v1323
  %1357 = vmatprep.subr.bf16.mxu0 0
  %1358 = vmatpush1.bf16.msra.mxu0 0
  %1359 = vmatprep.subr.bf16.mxu0 0
  %1360 = vmatpush1.bf16.msra.mxu0 0
  %1361 = vmatprep.subr.bf16.mxu0 0
  %1362 = vmatpush1.bf16.msra.mxu0 0
  %1363 = vmatprep.subr.bf16.mxu0 0
  %1364 = vmatpush1.bf16.msra.mxu0 0
  %1365 = vmatprep.subr.bf16.mxu0 0
  %1366 = vmatpush1.bf16.msra.mxu0 0
  %1367 = vmatprep.subr.bf16.mxu0 0
  %1368 = vmatpush1.bf16.msra.mxu0 0
  %1369 = vmatprep.subr.bf16.mxu0 0
  %1370 = vmatpush1.bf16.msra.mxu0 0
  %1371 = vmatprep.subr.bf16.mxu0 0
  %1372 = vmatpush1.bf16.msra.mxu0 0
  %1373 = vmatprep.mubr.bf16.mxu0 0
  %1374 = vmatmul.mubr.bf16.gmra.mrb[0].mxu0 %v1217
  %v1375 = vpop.f32.mrb[0].mxu0
  %v1376 = vadd.f32 %v1254, %v1375
  %v1377 = vpop.f32.mrb[0].mxu0
  %v1378 = vadd.f32 %v1258, %v1377
  %v1379 = vpop.f32.mrb[0].mxu0
  %v1380 = vadd.f32 %v1254, %v1379
  %v1381 = vpop.f32.mrb[0].mxu0
  %v1382 = vadd.f32 %v1258, %v1381
  %1383 = vmatprep.mubr.bf16.mxu0 0
  %1384 = vmatmul.mubr.bf16.gmra.mrb[0].mxu0 %v1218
  %v1385 = vpop.f32.mrb[0].mxu0
  %v1386 = vadd.f32 %v1254, %v1385
  %v1387 = vpop.f32.mrb[0].mxu0
  %v1388 = vadd.f32 %v1258, %v1387
  %v1389 = vpop.f32.mrb[0].mxu0
  %v1390 = vadd.f32 %v1254, %v1389
  %v1391 = vpop.f32.mrb[0].mxu0
  %v1392 = vadd.f32 %v1258, %v1391
  %1393 = vmatprep.mubr.bf16.mxu0 0
  %1394 = vmatmul.mubr.bf16.gmra.mrb[0].mxu0 %v1219
  %v1395 = vpop.f32.mrb[0].mxu0
  %v1396 = vadd.f32 %v1254, %v1395
  %v1397 = vpop.f32.mrb[0].mxu0
  %v1398 = vadd.f32 %v1258, %v1397
  %v1399 = vpop.f32.mrb[0].mxu0
  %v1400 = vadd.f32 %v1254, %v1399
  %v1401 = vpop.f32.mrb[0].mxu0
  %v1402 = vadd.f32 %v1258, %v1401
  %1403 = vmatprep.mubr.bf16.mxu0 0
  %1404 = vmatmul.mubr.bf16.gmra.mrb[0].mxu0 %v1220
  %v1405 = vpop.f32.mrb[0].mxu0
  %v1406 = vadd.f32 %v1254, %v1405
  %v1407 = vpop.f32.mrb[0].mxu0
  %v1408 = vadd.f32 %v1258, %v1407
  %v1409 = vpop.f32.mrb[0].mxu0
  %v1410 = vadd.f32 %v1254, %v1409
  %v1411 = vpop.f32.mrb[0].mxu0
  %v1412 = vadd.f32 %v1258, %v1411
  %1413 = vmatprep.mubr.bf16.mxu0 0
  %1414 = vmatmul.mubr.bf16.gmra.mrb[0].mxu0 %v1221
  %v1415 = vpop.f32.mrb[0].mxu0
  %v1416 = vadd.f32 %v1254, %v1415
  %v1417 = vpop.f32.mrb[0].mxu0
  %v1418 = vadd.f32 %v1258, %v1417
  %v1419 = vpop.f32.mrb[0].mxu0
  %v1420 = vadd.f32 %v1254, %v1419
  %v1421 = vpop.f32.mrb[0].mxu0
  %v1422 = vadd.f32 %v1258, %v1421
  %1423 = vmatprep.mubr.bf16.mxu0 0
  %1424 = vmatmul.mubr.bf16.gmra.mrb[0].mxu0 %v1222
  %v1425 = vpop.f32.mrb[0].mxu0
  %v1426 = vadd.f32 %v1254, %v1425
  %v1427 = vpop.f32.mrb[0].mxu0
  %v1428 = vadd.f32 %v1258, %v1427
  %v1429 = vpop.f32.mrb[0].mxu0
  %v1430 = vadd.f32 %v1254, %v1429
  %v1431 = vpop.f32.mrb[0].mxu0
  %v1432 = vadd.f32 %v1258, %v1431
  %1433 = vmatprep.mubr.bf16.mxu0 0
  %1434 = vmatmul.mubr.bf16.gmra.mrb[0].mxu0 %v1223
  %v1435 = vpop.f32.mrb[0].mxu0
  %v1436 = vadd.f32 %v1254, %v1435
  %v1437 = vpop.f32.mrb[0].mxu0
  %v1438 = vadd.f32 %v1258, %v1437
  %v1439 = vpop.f32.mrb[0].mxu0
  %v1440 = vadd.f32 %v1254, %v1439
  %v1441 = vpop.f32.mrb[0].mxu0
  %v1442 = vadd.f32 %v1258, %v1441
  %1443 = vmatprep.mubr.bf16.mxu0 0
  %1444 = vmatmul.mubr.bf16.gmra.mrb[0].mxu0 %v1224
  %v1445 = vpop.f32.mrb[0].mxu0
  %v1446 = vadd.f32 %v1254, %v1445
  %v1447 = vpop.f32.mrb[0].mxu0
  %v1448 = vadd.f32 %v1258, %v1447
  %v1449 = vpop.f32.mrb[0].mxu0
  %v1450 = vadd.f32 %v1254, %v1449
  %v1451 = vpop.f32.mrb[0].mxu0
  %v1452 = vadd.f32 %v1258, %v1451
  %1453 = vmatprep.mubr.bf16.mxu0 0
  %1454 = vmatmul.mubr.bf16.gmra.mrb[0].mxu0 %v1225
  %v1455 = vpop.f32.mrb[0].mxu0
  %v1456 = vadd.f32 %v1254, %v1455
  %v1457 = vpop.f32.mrb[0].mxu0
  %v1458 = vadd.f32 %v1258, %v1457
  %v1459 = vpop.f32.mrb[0].mxu0
  %v1460 = vadd.f32 %v1254, %v1459
  %v1461 = vpop.f32.mrb[0].mxu0
  %v1462 = vadd.f32 %v1258, %v1461
  %1463 = vmatprep.mubr.bf16.mxu0 0
  %1464 = vmatmul.mubr.bf16.gmra.mrb[0].mxu0 %v1226
  %v1465 = vpop.f32.mrb[0].mxu0
  %v1466 = vadd.f32 %v1254, %v1465
  %v1467 = vpop.f32.mrb[0].mxu0
  %v1468 = vadd.f32 %v1258, %v1467
  %v1469 = vpop.f32.mrb[0].mxu0
  %v1470 = vadd.f32 %v1254, %v1469
  %v1471 = vpop.f32.mrb[0].mxu0
  %v1472 = vadd.f32 %v1258, %v1471
  %1473 = vmatprep.mubr.bf16.mxu0 0
  %1474 = vmatmul.mubr.bf16.gmra.mrb[0].mxu0 %v1227
  %v1475 = vpop.f32.mrb[0].mxu0
  %v1476 = vadd.f32 %v1254, %v1475
  %v1477 = vpop.f32.mrb[0].mxu0
  %v1478 = vadd.f32 %v1258, %v1477
  %v1479 = vpop.f32.mrb[0].mxu0
  %v1480 = vadd.f32 %v1254, %v1479
  %v1481 = vpop.f32.mrb[0].mxu0
  %v1482 = vadd.f32 %v1258, %v1481
  %1483 = vmatprep.mubr.bf16.mxu0 0
  %1484 = vmatmul.mubr.bf16.gmra.mrb[0].mxu0 %v1228
  %v1485 = vpop.f32.mrb[0].mxu0
  %v1486 = vadd.f32 %v1254, %v1485
  %v1487 = vpop.f32.mrb[0].mxu0
  %v1488 = vadd.f32 %v1258, %v1487
  %v1489 = vpop.f32.mrb[0].mxu0
  %v1490 = vadd.f32 %v1254, %v1489
  %v1491 = vpop.f32.mrb[0].mxu0
  %v1492 = vadd.f32 %v1258, %v1491
  %1493 = vmatprep.mubr.bf16.mxu0 0
  %1494 = vmatmul.mubr.bf16.gmra.mrb[0].mxu0 %v1229
  %v1495 = vpop.f32.mrb[0].mxu0
  %v1496 = vadd.f32 %v1254, %v1495
  %v1497 = vpop.f32.mrb[0].mxu0
  %v1498 = vadd.f32 %v1258, %v1497
  %v1499 = vpop.f32.mrb[0].mxu0
  %v1500 = vadd.f32 %v1254, %v1499
  %v1501 = vpop.f32.mrb[0].mxu0
  %v1502 = vadd.f32 %v1258, %v1501
  %1503 = vmatprep.mubr.bf16.mxu0 0
  %1504 = vmatmul.mubr.bf16.gmra.mrb[0].mxu0 %v1230
  %v1505 = vpop.f32.mrb[0].mxu0
  %v1506 = vadd.f32 %v1254, %v1505
  %v1507 = vpop.f32.mrb[0].mxu0
  %v1508 = vadd.f32 %v1258, %v1507
  %v1509 = vpop.f32.mrb[0].mxu0
  %v1510 = vadd.f32 %v1254, %v1509
  %v1511 = vpop.f32.mrb[0].mxu0
  %v1512 = vadd.f32 %v1258, %v1511
  %1513 = vmatprep.mubr.bf16.mxu0 0
  %1514 = vmatmul.mubr.bf16.gmra.mrb[0].mxu0 %v1231
  %v1515 = vpop.f32.mrb[0].mxu0
  %v1516 = vadd.f32 %v1254, %v1515
  %v1517 = vpop.f32.mrb[0].mxu0
  %v1518 = vadd.f32 %v1258, %v1517
  %v1519 = vpop.f32.mrb[0].mxu0
  %v1520 = vadd.f32 %v1254, %v1519
  %v1521 = vpop.f32.mrb[0].mxu0
  %v1522 = vadd.f32 %v1258, %v1521
  %1523 = vmatprep.mubr.bf16.mxu0 0
  %1524 = vmatmul.mubr.bf16.gmra.mrb[0].mxu0 %v1232
  %v1525 = vpop.f32.mrb[0].mxu0
  %v1526 = vadd.f32 %v1254, %v1525
  %v1527 = vpop.f32.mrb[0].mxu0
  %v1528 = vadd.f32 %v1258, %v1527
  %v1529 = vpop.f32.mrb[0].mxu0
  %v1530 = vadd.f32 %v1254, %v1529
  %v1531 = vpop.f32.mrb[0].mxu0
  %v1532 = vadd.f32 %v1258, %v1531
  %1533 = vdwg.mxu0
  %v1534 = vmax.f32 %v1376, 0.0
  %v1535 = vmax.f32 %v1378, 0.0
  %v1536 = vmax.f32 %v1380, 0.0
  %v1537 = vmax.f32 %v1382, 0.0
  %v1538 = vmax.f32 %v1386, 0.0
  %v1539 = vmax.f32 %v1388, 0.0
  %v1540 = vmax.f32 %v1390, 0.0
  %v1541 = vmax.f32 %v1392, 0.0
  %v1542 = vmax.f32 %v1396, 0.0
  %v1543 = vmax.f32 %v1398, 0.0
  %v1544 = vmax.f32 %v1400, 0.0
  %v1545 = vmax.f32 %v1402, 0.0
  %v1546 = vmax.f32 %v1406, 0.0
  %v1547 = vmax.f32 %v1408, 0.0
  %v1548 = vmax.f32 %v1410, 0.0
  %v1549 = vmax.f32 %v1412, 0.0
  %v1550 = vmax.f32 %v1416, 0.0
  %v1551 = vmax.f32 %v1418, 0.0
  %v1552 = vmax.f32 %v1420, 0.0
  %v1553 = vmax.f32 %v1422, 0.0
  %v1554 = vmax.f32 %v1426, 0.0
  %v1555 = vmax.f32 %v1428, 0.0
  %v1556 = vmax.f32 %v1430, 0.0
  %v1557 = vmax.f32 %v1432, 0.0
  %v1558 = vmax.f32 %v1436, 0.0
  %v1559 = vmax.f32 %v1438, 0.0
  %v1560 = vmax.f32 %v1440, 0.0
  %v1561 = vmax.f32 %v1442, 0.0
  %v1562 = vmax.f32 %v1446, 0.0
  %v1563 = vmax.f32 %v1448, 0.0
  %v1564 = vmax.f32 %v1450, 0.0
  %v1565 = vmax.f32 %v1452, 0.0
  %v1566 = vmax.f32 %v1456, 0.0
  %v1567 = vmax.f32 %v1458, 0.0
  %v1568 = vmax.f32 %v1460, 0.0
  %v1569 = vmax.f32 %v1462, 0.0
  %v1570 = vmax.f32 %v1466, 0.0
  %v1571 = vmax.f32 %v1468, 0.0
  %v1572 = vmax.f32 %v1470, 0.0
  %v1573 = vmax.f32 %v1472, 0.0
  %v1574 = vmax.f32 %v1476, 0.0
  %v1575 = vmax.f32 %v1478, 0.0
  %v1576 = vmax.f32 %v1480, 0.0
  %v1577 = vmax.f32 %v1482, 0.0
  %v1578 = vmax.f32 %v1486, 0.0
  %v1579 = vmax.f32 %v1488, 0.0
  %v1580 = vmax.f32 %v1490, 0.0
  %v1581 = vmax.f32 %v1492, 0.0
  %v1582 = vmax.f32 %v1496, 0.0
  %v1583 = vmax.f32 %v1498, 0.0
  %v1584 = vmax.f32 %v1500, 0.0
  %v1585 = vmax.f32 %v1502, 0.0
  %v1586 = vmax.f32 %v1506, 0.0
  %v1587 = vmax.f32 %v1508, 0.0
  %v1588 = vmax.f32 %v1510, 0.0
  %v1589 = vmax.f32 %v1512, 0.0
  %v1590 = vmax.f32 %v1516, 0.0
  %v1591 = vmax.f32 %v1518, 0.0
  %v1592 = vmax.f32 %v1520, 0.0
  %v1593 = vmax.f32 %v1522, 0.0
  %v1594 = vmax.f32 %v1526, 0.0
  %v1595 = vmax.f32 %v1528, 0.0
  %v1596 = vmax.f32 %v1530, 0.0
  %v1597 = vmax.f32 %v1532, 0.0
  %v1598 = vld [vmem:[%s7] sm:$0xf]
  %v1599 = vmax.f32 %v1534, %v1536
  %v1600 = vmax.f32 %v1599, %v1538
  %v1601 = vmax.f32 %v1600, %v1540
  %v1602 = vmax.f32 %v1601, %v1542
  %v1603 = vmax.f32 %v1602, %v1544
  %v1604 = vmax.f32 %v1603, %v1546
  %v1605 = vmax.f32 %v1604, %v1548
  %v1606 = vmax.f32 %v1605, %v1550
  %v1607 = vmax.f32 %v1606, %v1552
  %v1608 = vmax.f32 %v1607, %v1554
  %v1609 = vmax.f32 %v1608, %v1556
  %v1610 = vmax.f32 %v1609, %v1558
  %v1611 = vmax.f32 %v1610, %v1560
  %v1612 = vmax.f32 %v1611, %v1562
  %v1613 = vmax.f32 %v1612, %v1564
  %v1614 = vrot.slane %v1613, 4
  %v1615 = vmax.f32 %v1613, %v1614
  %v1616 = vrot.slane %v1615, 2
  %v1617 = vmax.f32 %v1615, %v1616
  %v1618 = vrot.slane %v1617, 1
  %v1619 = vmax.f32 %v1617, %v1618
  %v1620 = vmax.f32 %v1535, %v1537
  %v1621 = vmax.f32 %v1620, %v1539
  %v1622 = vmax.f32 %v1621, %v1541
  %v1623 = vmax.f32 %v1622, %v1543
  %v1624 = vmax.f32 %v1623, %v1545
  %v1625 = vmax.f32 %v1624, %v1547
  %v1626 = vmax.f32 %v1625, %v1549
  %v1627 = vmax.f32 %v1626, %v1551
  %v1628 = vmax.f32 %v1627, %v1553
  %v1629 = vmax.f32 %v1628, %v1555
  %v1630 = vmax.f32 %v1629, %v1557
  %v1631 = vmax.f32 %v1630, %v1559
  %v1632 = vmax.f32 %v1631, %v1561
  %v1633 = vmax.f32 %v1632, %v1563
  %v1634 = vmax.f32 %v1633, %v1565
  %v1635 = vrot.slane %v1634, 4
  %v1636 = vmax.f32 %v1634, %v1635
  %v1637 = vrot.slane %v1636, 2
  %v1638 = vmax.f32 %v1636, %v1637
  %v1639 = vrot.slane %v1638, 1
  %v1640 = vmax.f32 %v1638, %v1639
  %v1641 = vmax.f32 %v1566, %v1568
  %v1642 = vmax.f32 %v1641, %v1570
  %v1643 = vmax.f32 %v1642, %v1572
  %v1644 = vmax.f32 %v1643, %v1574
  %v1645 = vmax.f32 %v1644, %v1576
  %v1646 = vmax.f32 %v1645, %v1578
  %v1647 = vmax.f32 %v1646, %v1580
  %v1648 = vmax.f32 %v1647, %v1582
  %v1649 = vmax.f32 %v1648, %v1584
  %v1650 = vmax.f32 %v1649, %v1586
  %v1651 = vmax.f32 %v1650, %v1588
  %v1652 = vmax.f32 %v1651, %v1590
  %v1653 = vmax.f32 %v1652, %v1592
  %v1654 = vmax.f32 %v1653, %v1594
  %v1655 = vmax.f32 %v1654, %v1596
  %v1656 = vrot.slane %v1655, 4
  %v1657 = vmax.f32 %v1655, %v1656
  %v1658 = vrot.slane %v1657, 2
  %v1659 = vmax.f32 %v1657, %v1658
  %v1660 = vrot.slane %v1659, 1
  %v1661 = vmax.f32 %v1659, %v1660
  %v1662 = vmax.f32 %v1567, %v1569
  %v1663 = vmax.f32 %v1662, %v1571
  %v1664 = vmax.f32 %v1663, %v1573
  %v1665 = vmax.f32 %v1664, %v1575
  %v1666 = vmax.f32 %v1665, %v1577
  %v1667 = vmax.f32 %v1666, %v1579
  %v1668 = vmax.f32 %v1667, %v1581
  %v1669 = vmax.f32 %v1668, %v1583
  %v1670 = vmax.f32 %v1669, %v1585
  %v1671 = vmax.f32 %v1670, %v1587
  %v1672 = vmax.f32 %v1671, %v1589
  %v1673 = vmax.f32 %v1672, %v1591
  %v1674 = vmax.f32 %v1673, %v1593
  %v1675 = vmax.f32 %v1674, %v1595
  %v1676 = vmax.f32 %v1675, %v1597
  %v1677 = vrot.slane %v1676, 4
  %v1678 = vmax.f32 %v1676, %v1677
  %v1679 = vrot.slane %v1678, 2
  %v1680 = vmax.f32 %v1678, %v1679
  %v1681 = vrot.slane %v1680, 1
  %v1682 = vmax.f32 %v1680, %v1681
  %v1687 = vcombine.low %v1619, %v1640
  %v1689 = vunpack.c.l.s4 1983009808
  %v1690 = vunpack.c.0.s8 %v1689
  %v1691 = vlaneseq
  %v1692 = vshrl.u32 %v1691, 7
  %v1693 = vsub.s32 %v1690, %v1692
  %v1694 = vrot.slane %v1687, %v1693
  %v1695 = vcombine.low %v1661, %v1682
  %v1697 = vunpack.c.l.s4 1983009808
  %v1698 = vunpack.c.0.s8 %v1697
  %v1699 = vlaneseq
  %v1700 = vshrl.u32 %v1699, 7
  %v1701 = vsub.s32 %v1698, %v1700
  %v1702 = vrot.slane %v1695, %v1701
  %vm1703 = vcmask 1044484
  %v1704 = vsel %vm1703, %v1694, %v1694
  %vm1705 = vcmask 1046534
  %v1706 = vsel %vm1705, %v1694, %v1704
  %v1707 = vrot.slane %v1702, 7
  %vm1708 = vcmask 1041409
  %v1709 = vsel %vm1708, %v1707, %v1706
  %vm1710 = vcmask 1043459
  %v1711 = vsel %vm1710, %v1707, %v1709
  %vm1712 = vcmask 1045509
  %v1713 = vsel %vm1712, %v1707, %v1711
  %vm1714 = vcmask 1047559
  %v1715 = vsel %vm1714, %v1707, %v1713
  %v1717 = vmax.f32 %v1598, %v1715
  %1718 = vst [vmem:[%s7] sm:$0xf] %v1717
  // Predicated region
  $region34: #{single_frame_demo_encoder.1} parent=0 // pred_check
    _
  $region35: #{single_frame_demo_encoder.1} parent=0 // pred_check_branch
    %1720 = sbr.rel (0) target = $region37
  $region36: #{single_frame_demo_encoder.1} parent=0 // pred_region
    _
  $region37: #{single_frame_demo_encoder.1} parent=0 // pred_fallthru
    _
  // Predicated region
  $region38: #{single_frame_demo_encoder.1} parent=0 // pred_check
    _
  $region39: #{single_frame_demo_encoder.1} parent=0 // pred_check_branch
    %1722 = sbr.rel (0) target = $region41
  $region40: #{single_frame_demo_encoder.1} parent=0 // pred_region
    _
  $region41: #{single_frame_demo_encoder.1} parent=0 // pred_fallthru
    _

</llo_original>
